<compile_context>
chip_gen: v7x
topology: tpu7x:2x2x1
jax: 0.10.0
libtpu: 0.0.40
codegen_flags: <defaults>
</compile_context>

<pallas_src>
import functools
import math

import jax
import jax.numpy as jnp
from jax import lax
from jax.experimental import pallas as pl
from jax.experimental.pallas import tpu as pltpu


# Pack the k*k taps into one big-K matmul when Cin is below this; for wider
# Cin a per-tap dot already fills the MXU contraction and packing only adds
# relayout copies.
_PACK_CIN_THRESHOLD = 256


def _round_up(x: int, m: int) -> int:
    return ((x + m - 1) // m) * m


# ---------------------------------------------------------------------------
# Pallas kernel: one (image, row-slab) grid step.
# ---------------------------------------------------------------------------
def _conv_slab_kernel(xm_ref, xh_ref, w_ref, b_ref, o_ref, win_ref,
                      *, k, d, w_pad, tile_m, halo_rows):
    """xm_ref : [TILE_M, Cin]       slab of flattened padded-image rows
       xh_ref : [HB, Cin]           halo rows (start of the next slab)
       w_ref  : [Cout, k*k*Cin]     weights, columns in (kh, kw, ci) order
       b_ref  : [Cout, 1]
       o_ref  : [Cout, TILE_M]      lane-dense, channel-major output slab
       win_ref: [TILE_M + HB, Cin]  VMEM scratch: contiguous slab+halo window
    """
    cin = xm_ref.shape[-1]

    # Stitch the contiguous input window (slab + halo) once in VMEM.
    win_ref[pl.ds(0, tile_m), :] = xm_ref[...]
    win_ref[pl.ds(tile_m, halo_rows), :] = xh_ref[...]

    offs = [kh * d * w_pad + kw * d for kh in range(k) for kw in range(k)]

    if cin < _PACK_CIN_THRESHOLD:
        # Pack the k*k shifted tap views along the lane axis and contract the
        # whole k*k*Cin axis in a single MXU call.
        taps = [win_ref[pl.ds(off, tile_m), :] for off in offs]
        lhs = taps[0] if len(taps) == 1 else jnp.concatenate(taps, axis=1)
        acc = lax.dot_general(
            w_ref[...], lhs,
            dimension_numbers=(((1,), (1,)), ((), ())),
            preferred_element_type=jnp.float32)                 # [Cout, TILE_M]
    else:
        # Wide-Cin fallback: per-tap dots accumulated in a local value
        # (still no VMEM accumulator RMW).
        acc = None
        for t, off in enumerate(offs):
            part = lax.dot_general(
                w_ref[:, pl.ds(t * cin, cin)],
                win_ref[pl.ds(off, tile_m), :],
                dimension_numbers=(((1,), (1,)), ((), ())),
                preferred_element_type=jnp.float32)
            acc = part if acc is None else acc + part

    acc = acc + b_ref[...].astype(jnp.float32)                  # [Cout,1] bcast
    o_ref[...] = acc.astype(o_ref.dtype)                        # single store


# ---------------------------------------------------------------------------
# Wrapper reproducing nn.Conv2d(Cin, Cout, k, s, p, d) semantics (NCHW in/out).
# ---------------------------------------------------------------------------
@functools.partial(jax.jit, static_argnames=("k", "s", "p", "d"))
def conv_block_forward(x, weight, bias, *, k=3, s=1, p=0, d=1):
    """x: [N, Cin, H, W], weight: [Cout, Cin, k, k], bias: [Cout] -> [N, Cout, Ho, Wo]."""
    N, Cin, H, W = x.shape
    Cout = weight.shape[0]

    H_pad, W_pad = H + 2 * p, W + 2 * p
    Ho1 = H_pad - d * (k - 1)              # dense (stride-1) output extents
    Wo1 = W_pad - d * (k - 1)
    assert Ho1 > 0 and Wo1 > 0, "kernel/dilation larger than padded input"
    Ho = (Ho1 - 1) // s + 1
    Wo = (Wo1 - 1) // s + 1

    R = H_pad * W_pad                      # flattened padded rows per image
    M = (Ho1 - 1) * W_pad + Wo1            # dense output rows (flat h*W_pad+w)
    halo = (k - 1) * d * W_pad + (k - 1) * d   # == R - M extra rows per window
    K = k * k * Cin

    # ---- slab sizing -------------------------------------------------------
    # Halo block: multiple of 8 sublanes AND a divisor of TILE_M so its
    # index_map stays a plain block index ((j+1)*TILE_M / HB).
    HB = _round_up(max(halo, 8), 8)
    unit = math.lcm(128, HB)               # multi-slab TILE_M alignment

    try:
        vmem_cap = int(pltpu.get_tpu_info().vmem_capacity_bytes)
    except Exception:                      # conservative fallback (v7x-safe)
        vmem_cap = 64 * 1024 * 1024
    vmem_limit = min(int(0.75 * vmem_cap), 100 * 1024 * 1024)

    itemsize = jnp.dtype(x.dtype).itemsize
    per_row_bytes = (K * 4                     # packed LHS working set (f32-ish)
                     + 3 * Cin * itemsize      # slab block (x2 buffers) + window
                     + 2 * Cout * 4)           # f32 result + output block
    slab_budget = max(4 << 20, vmem_cap // 8)
    target_rows = max(128, min(8192, slab_budget // max(per_row_bytes, 1)))

    tile_m = _round_up(min(M, target_rows), unit)
    if tile_m >= M:                        # single slab: only halo/8 alignment
        tile_m = _round_up(M, HB)
    num_slabs = (M + tile_m - 1) // tile_m
    m_pad = num_slabs * tile_m
    r_pad = max(R, m_pad + HB)             # keep every (slab, halo) block in-bounds

    # ---- host-side layout plumbing (one fused transpose/pad pass) ----------
    x_nhwc = jnp.transpose(x, (0, 2, 3, 1))                        # [N,H,W,Cin]
    x_flat = jnp.pad(x_nhwc, ((0, 0), (p, p), (p, p), (0, 0))).reshape(N, R, Cin)
    x_flat = jnp.pad(x_flat, ((0, 0), (0, r_pad - R), (0, 0)))     # [N,r_pad,Cin]

    # [Cout, Cin, kh, kw] -> [Cout, (kh, kw, ci)]  (matches in-kernel tap order)
    w_ck = jnp.transpose(weight, (0, 2, 3, 1)).reshape(Cout, K)
    b_c1 = bias.reshape(Cout, 1)

    kernel = functools.partial(_conv_slab_kernel, k=k, d=d, w_pad=W_pad,
                               tile_m=tile_m, halo_rows=HB)

    flops = 2 * N * m_pad * K * Cout
    bytes_accessed = (N * num_slabs * (tile_m + HB) * Cin * itemsize
                      + Cout * K * jnp.dtype(weight.dtype).itemsize
                      + Cout * jnp.dtype(bias.dtype).itemsize
                      + N * m_pad * Cout * itemsize)

    out = pl.pallas_call(
        kernel,
        out_shape=jax.ShapeDtypeStruct((N, Cout, m_pad), x.dtype),
        grid_spec=pltpu.PrefetchScalarGridSpec(
            num_scalar_prefetch=0,
            grid=(N, num_slabs),
            in_specs=[
                # Row slab [j*tile_m, (j+1)*tile_m).
                pl.BlockSpec((None, tile_m, Cin), lambda n, j: (n, j, 0)),
                # Halo: first HB rows of the *next* slab (same array, re-fetched).
                pl.BlockSpec((None, HB, Cin),
                             lambda n, j: (n, (j + 1) * (tile_m // HB), 0)),
                # Weights / bias stay VMEM-resident (constant index_map).
                pl.BlockSpec((Cout, K), lambda n, j: (0, 0)),
                pl.BlockSpec((Cout, 1), lambda n, j: (0, 0)),
            ],
            out_specs=pl.BlockSpec((None, Cout, tile_m), lambda n, j: (n, 0, j)),
            scratch_shapes=[pltpu.VMEM((tile_m + HB, Cin), x.dtype)],
        ),
        compiler_params=pltpu.CompilerParams(
            dimension_semantics=("parallel", "parallel"),
            vmem_limit_bytes=vmem_limit,
        ),
        cost_estimate=pl.CostEstimate(
            flops=flops, transcendentals=0, bytes_accessed=bytes_accessed),
    )(x_flat, x_flat, w_ck, b_c1)                                  # [N,Cout,m_pad]

    # Un-flatten the dense output grid (already channel-major == NCHW order),
    # drop the (k-1)*d wrap-around columns and apply the stride subsample.
    n_keep = Ho1 * W_pad
    if m_pad < n_keep:
        out = jnp.pad(out, ((0, 0), (0, 0), (0, n_keep - m_pad)))
    out = out[:, :, :n_keep].reshape(N, Cout, Ho1, W_pad)
    out = out[:, :, : (Ho - 1) * s + 1 : s, : (Wo - 1) * s + 1 : s]
    return out                                                     # [N,Cout,Ho,Wo]


if __name__ == "__main__":
    # ConvBlock defaults: k=3, s=1, p=0, d=1
    N, Cin, H, W = 2, 4, 16, 16
    Cout, k, s, p, d = 8, 3, 1, 0, 1

    key = jax.random.PRNGKey(0)
    kx, kwt, kb = jax.random.split(key, 3)
    x = jax.random.normal(kx, (N, Cin, H, W), dtype=jnp.float32)
    fan_in = Cin * k * k
    bound = 1.0 / (fan_in ** 0.5)
    weight = jax.random.uniform(kwt, (Cout, Cin, k, k), jnp.float32, -bound, bound)
    bias = jax.random.uniform(kb, (Cout,), jnp.float32, -bound, bound)

    out = conv_block_forward(x, weight, bias, k=k, s=s, p=p, d=d)
    out = jax.block_until_ready(out)

    # Cross-check against XLA's conv.
    ref = lax.conv_general_dilated(
        x, weight,
        window_strides=(s, s),
        padding=[(p, p), (p, p)],
        rhs_dilation=(d, d),
        dimension_numbers=("NCHW", "OIHW", "NCHW"),
    ) + bias.reshape(1, Cout, 1, 1)

    assert out.shape == ref.shape == (N, Cout, 14, 14), out.shape
    assert jnp.allclose(out, ref, atol=1e-4, rtol=1e-4), "mismatch vs reference conv"
    print("KERNEL_OK")
</pallas_src>

<mosaic_0001>
module attributes {stable_mosaic.version = 11 : i64} {
  func.func @_conv_slab_kernel(%arg0: i32, %arg1: i32, %arg2: memref<1x240x4xf32, #tpu.memory_space<vmem>>, %arg3: memref<1x40x4xf32, #tpu.memory_space<vmem>>, %arg4: memref<8x36xf32, #tpu.memory_space<vmem>>, %arg5: memref<8x1xf32, #tpu.memory_space<vmem>>, %arg6: memref<1x8x240xf32, #tpu.memory_space<vmem>>, %arg7: memref<280x4xf32, #tpu.memory_space<vmem>>) attributes {dimension_semantics = [#tpu.dimension_semantics<parallel>, #tpu.dimension_semantics<parallel>], iteration_bounds = array<i64: 2, 1>, scalar_prefetch = 0 : i64, scratch_operands = 1 : i64, tpu.core_type = #tpu.core_type<tc>, window_params = [{transform_indices = @transform_0, window_bounds = array<i64: 1, 240, 4>}, {transform_indices = @transform_1, window_bounds = array<i64: 1, 40, 4>}, {pipeline_mode = #tpu.pipeline_mode<synchronous>, transform_indices = @transform_2, window_bounds = array<i64: 8, 36>}, {pipeline_mode = #tpu.pipeline_mode<synchronous>, transform_indices = @transform_3, window_bounds = array<i64: 8, 1>}, {transform_indices = @transform_4, window_bounds = array<i64: 1, 8, 240>}]} {
    %c0 = arith.constant 0 : index
    %c0_0 = arith.constant 0 : index
    %c0_1 = arith.constant 0 : index
    %0 = vector.load %arg2[%c0, %c0_0, %c0_1] : memref<1x240x4xf32, #tpu.memory_space<vmem>>, vector<1x240x4xf32>
    %1 = vector.shape_cast %0 : vector<1x240x4xf32> to vector<240x4xf32>
    %c0_2 = arith.constant 0 : index
    %c0_3 = arith.constant 0 : index
    %2 = vector.load %arg7[%c0_2, %c0_3] : memref<280x4xf32, #tpu.memory_space<vmem>>, vector<240x4xf32>
    tpu.vector_store %arg7[%c0_2, %c0_3], %1 {strides = array<i32>} : memref<280x4xf32, #tpu.memory_space<vmem>>, vector<240x4xf32>,
    %c0_4 = arith.constant 0 : index
    %c0_5 = arith.constant 0 : index
    %c0_6 = arith.constant 0 : index
    %3 = vector.load %arg3[%c0_4, %c0_5, %c0_6] : memref<1x40x4xf32, #tpu.memory_space<vmem>>, vector<1x40x4xf32>
    %4 = vector.shape_cast %3 : vector<1x40x4xf32> to vector<40x4xf32>
    %c240 = arith.constant 240 : index
    %c0_7 = arith.constant 0 : index
    %5 = vector.load %arg7[%c240, %c0_7] : memref<280x4xf32, #tpu.memory_space<vmem>>, vector<40x4xf32>
    tpu.vector_store %arg7[%c240, %c0_7], %4 {strides = array<i32>} : memref<280x4xf32, #tpu.memory_space<vmem>>, vector<40x4xf32>,
    %c0_8 = arith.constant 0 : index
    %c0_9 = arith.constant 0 : index
    %6 = vector.load %arg7[%c0_8, %c0_9] : memref<280x4xf32, #tpu.memory_space<vmem>>, vector<240x4xf32>
    %c1 = arith.constant 1 : index
    %c0_10 = arith.constant 0 : index
    %7 = vector.load %arg7[%c1, %c0_10] : memref<280x4xf32, #tpu.memory_space<vmem>>, vector<240x4xf32>
    %c2 = arith.constant 2 : index
    %c0_11 = arith.constant 0 : index
    %8 = vector.load %arg7[%c2, %c0_11] : memref<280x4xf32, #tpu.memory_space<vmem>>, vector<240x4xf32>
    %c16 = arith.constant 16 : index
    %c0_12 = arith.constant 0 : index
    %9 = vector.load %arg7[%c16, %c0_12] : memref<280x4xf32, #tpu.memory_space<vmem>>, vector<240x4xf32>
    %c17 = arith.constant 17 : index
    %c0_13 = arith.constant 0 : index
    %10 = vector.load %arg7[%c17, %c0_13] : memref<280x4xf32, #tpu.memory_space<vmem>>, vector<240x4xf32>
    %c18 = arith.constant 18 : index
    %c0_14 = arith.constant 0 : index
    %11 = vector.load %arg7[%c18, %c0_14] : memref<280x4xf32, #tpu.memory_space<vmem>>, vector<240x4xf32>
    %c32 = arith.constant 32 : index
    %c0_15 = arith.constant 0 : index
    %12 = vector.load %arg7[%c32, %c0_15] : memref<280x4xf32, #tpu.memory_space<vmem>>, vector<240x4xf32>
    %c33 = arith.constant 33 : index
    %c0_16 = arith.constant 0 : index
    %13 = vector.load %arg7[%c33, %c0_16] : memref<280x4xf32, #tpu.memory_space<vmem>>, vector<240x4xf32>
    %c34 = arith.constant 34 : index
    %c0_17 = arith.constant 0 : index
    %14 = vector.load %arg7[%c34, %c0_17] : memref<280x4xf32, #tpu.memory_space<vmem>>, vector<240x4xf32>
    %15 = tpu.concatenate %6, %7, %8, %9, %10, %11, %12, %13, %14 in 1 : vector<240x4xf32>, vector<240x4xf32>, vector<240x4xf32>, vector<240x4xf32>, vector<240x4xf32>, vector<240x4xf32>, vector<240x4xf32>, vector<240x4xf32>, vector<240x4xf32> -> vector<240x36xf32>
    %c0_18 = arith.constant 0 : index
    %c0_19 = arith.constant 0 : index
    %16 = vector.load %arg4[%c0_18, %c0_19] : memref<8x36xf32, #tpu.memory_space<vmem>>, vector<8x36xf32>
    %cst = arith.constant dense<0.000000e+00> : vector<8x240xf32>
    %17 = tpu.matmul %16, %15, %cst {dimension_numbers = #tpu.dot_dimension_numbers<[1], [1], [0], [0], [0, 0, 1, 0], [], []>} : vector<8x36xf32>, vector<240x36xf32>, vector<8x240xf32> -> vector<8x240xf32>
    %c0_20 = arith.constant 0 : index
    %c0_21 = arith.constant 0 : index
    %18 = vector.load %arg5[%c0_20, %c0_21] : memref<8x1xf32, #tpu.memory_space<vmem>>, vector<8x1xf32>
    %19 = vector.broadcast %18 : vector<8x1xf32> to vector<8x240xf32>
    %20 = arith.addf %17, %19 : vector<8x240xf32>
    %c0_22 = arith.constant 0 : index
    %c0_23 = arith.constant 0 : index
    %c0_24 = arith.constant 0 : index
    %21 = vector.load %arg6[%c0_22, %c0_23, %c0_24] : memref<1x8x240xf32, #tpu.memory_space<vmem>>, vector<1x8x240xf32>
    %22 = vector.shape_cast %21 : vector<1x8x240xf32> to vector<8x240xf32>
    %23 = vector.shape_cast %20 : vector<8x240xf32> to vector<1x8x240xf32>
    tpu.vector_store %arg6[%c0_22, %c0_23, %c0_24], %23 {strides = array<i32>} : memref<1x8x240xf32, #tpu.memory_space<vmem>>, vector<1x8x240xf32>,
    return
  }
  func.func @transform_0(%arg0: i32, %arg1: i32) -> (i32, i32, i32) {
    %c0_i32 = arith.constant 0 : i32
    %c0_i32_0 = arith.constant 0 : i32
    return %arg0, %arg1, %c0_i32 : i32, i32, i32
  }
  func.func @transform_1(%arg0: i32, %arg1: i32) -> (i32, i32, i32) {
    %c1_i32 = arith.constant 1 : i32
    %0 = arith.addi %arg1, %c1_i32 : i32
    %c6_i32 = arith.constant 6 : i32
    %1 = arith.muli %0, %c6_i32 : i32
    %c0_i32 = arith.constant 0 : i32
    %c0_i32_0 = arith.constant 0 : i32
    return %arg0, %1, %c0_i32 : i32, i32, i32
  }
  func.func @transform_2(%arg0: i32, %arg1: i32) -> (i32, i32) {
    %c0_i32 = arith.constant 0 : i32
    %c0_i32_0 = arith.constant 0 : i32
    %c0_i32_1 = arith.constant 0 : i32
    return %c0_i32, %c0_i32_0 : i32, i32
  }
  func.func @transform_3(%arg0: i32, %arg1: i32) -> (i32, i32) {
    %c0_i32 = arith.constant 0 : i32
    %c0_i32_0 = arith.constant 0 : i32
    %c0_i32_1 = arith.constant 0 : i32
    return %c0_i32, %c0_i32_0 : i32, i32
  }
  func.func @transform_4(%arg0: i32, %arg1: i32) -> (i32, i32, i32) {
    %c0_i32 = arith.constant 0 : i32
    %c0_i32_0 = arith.constant 0 : i32
    return %arg0, %c0_i32, %arg1 : i32, i32, i32
  }
}

</mosaic_0001>

<llo_original>
// kernel: conv_block_forward.1
$region0: #{conv_block_forward.1}
  #allocation0 [shape = 'u32[]', space=smem, size = 0x4, offset = 0x4, fixed_abs, tag = 'smem constant byte address 0x4 - core index']
  #allocation1 [shape = 'u32[144,128]{1,0:T(1,128)}', space=vmem, size = 0x12000, scoped, tag = 'internal scratch']
  #allocation2 [shape = 'f32[280,4]{1,0:T(8,128)}', space=vmem, size = 0x23000, scoped, tag = 'scratch operand']
  %s0 = inlined_call_operand.vmem [shape: f32[2,280,4], index: 0, kind: input, shape index: {}, may-alias: {0,1}]
  %s1 = inlined_call_operand.vmem [shape: f32[2,280,4], index: 1, kind: input, shape index: {}, may-alias: {0,1}]
  %s2 = inlined_call_operand.vmem [shape: f32[8,36], index: 2, kind: input, shape index: {}]
  %s3 = inlined_call_operand.vmem [shape: f32[8,1], index: 3, kind: input, shape index: {}]
  %s4 = inlined_call_operand.vmem [shape: f32[2,8,240], index: 4, kind: output, shape index: {}]
  %s5 = sld [smem:[#allocation0]]
  $region49: #{conv_block_forward.1} parent=0
    _
  %s7 = ssub.s32 1, %s5
  %s8 = scalar_select 0, %s7, %s5
  loop: start=0, step=1, limit=4
  $region2: #{conv_block_forward.1} parent=0 // loop_pre_header
    _
  $region3: #{conv_block_forward.1} parent=0 // loop_header
    %s10 = sphi 0, %s14
    %p11 = scmp.ge.s32.totalorder %s10, 4
    %s17 = sphi 0, %s29
    %s18 = sphi 0, %s25
    %s19 = sphi 0, %s17
    %s20 = sphi 0, %s18
    %s21 = sphi 0, %s19
    %s22 = sphi 0, %s20
    %s34 = sphi 0, %s36
    %s37 = sphi 0, %s34
    %s38 = sphi 0, %s37
    %s54 = sphi 0, %s38
    %s66 = sphi 0, %s68
    %s69 = sphi 0, %s66
    %s70 = sphi 0, %s69
    %s86 = sphi 0, %s70
    %s90 = sphi 0, %s90
    %s92 = sphi 0, %s90
    %s93 = sphi 0, %s92
    %s107 = sphi 0, %s93
    %s111 = sphi 0, %s111
    %s113 = sphi 0, %s111
    %s114 = sphi 0, %s113
    %s128 = sphi 0, %s114
    %s136 = sphi 0, %s138
    %s139 = sphi 0, %s136
    %s140 = sphi 0, %s139
    %s156 = sphi 0, %s140
  $region4: #{conv_block_forward.1} parent=0 // loop_header_branch
    %13 = sbr.rel (%p11) target = $region8
  $region5: #{conv_block_forward.1} parent=0 // loop_body
    %s15 = ssub.s32 %s10, 1
    %s16 = ssub.s32 %s10, 2
    %s23 = sadd.s32 1, %s18
    %p24 = scmp.ge.s32.totalorder %s23, 1
    %s25 = scalar_select %p24, 0, %s23
    %s26 = sadd.s32 1, %s17
    %s27 = scalar_select %p24, %s26, %s17
    %p28 = scmp.ge.s32.totalorder %s27, 2
    %s29 = scalar_select %p28, 0, %s27
    %s30 = ssub.s32 %s17, %s29
    %s31 = ssub.s32 %s18, %s25
    %s32 = sor.u32 %s30, %s31
    %p33 = scmp.eq.s32.totalorder %s32, 0
    %s35 = sadd.s32 %s34, 1
    %s36 = scalar_select %p33, %s34, %s35
    %p39 = pneg %p33
    %p40 = scmp.eq.s32.totalorder %s10, 1
    %p41 = por %p39, %p40
    %p42 = scmp.ne.s32.totalorder %s34, %s37
    %p43 = scmp.eq.s32.totalorder %s10, 0
    %p44 = por %p42, %p43
    %p45 = scmp.ne.s32.totalorder %s34, %s37
    %p46 = scmp.eq.s32.totalorder %s15, 1
    %p47 = por %p45, %p46
    %p48 = scmp.ne.s32.totalorder %s37, %s38
    %p49 = scmp.eq.s32.totalorder %s15, 0
    %p50 = por %p48, %p49
    %p51 = scmp.ne.s32.totalorder %s37, %s38
    %p52 = scmp.eq.s32.totalorder %s16, 1
    %p53 = por %p51, %p52
    %p55 = scmp.ne.s32.totalorder %s38, %s54
    %p56 = scmp.eq.s32.totalorder %s16, 0
    %p57 = por %p55, %p56
    %s58 = sadd.s32 %s18, 1
    %s59 = smul.u32 %s58, 6
    %s60 = sadd.s32 %s25, 1
    %s61 = smul.u32 %s60, 6
    %s62 = ssub.s32 %s17, %s29
    %s63 = ssub.s32 %s59, %s61
    %s64 = sor.u32 %s62, %s63
    %p65 = scmp.eq.s32.totalorder %s64, 0
    %s67 = sadd.s32 %s66, 1
    %s68 = scalar_select %p65, %s66, %s67
    %p71 = pneg %p65
    %p72 = scmp.eq.s32.totalorder %s10, 1
    %p73 = por %p71, %p72
    %p74 = scmp.ne.s32.totalorder %s66, %s69
    %p75 = scmp.eq.s32.totalorder %s10, 0
    %p76 = por %p74, %p75
    %p77 = scmp.ne.s32.totalorder %s66, %s69
    %p78 = scmp.eq.s32.totalorder %s15, 1
    %p79 = por %p77, %p78
    %p80 = scmp.ne.s32.totalorder %s69, %s70
    %p81 = scmp.eq.s32.totalorder %s15, 0
    %p82 = por %p80, %p81
    %p83 = scmp.ne.s32.totalorder %s69, %s70
    %p84 = scmp.eq.s32.totalorder %s16, 1
    %p85 = por %p83, %p84
    %p87 = scmp.ne.s32.totalorder %s70, %s86
    %p88 = scmp.eq.s32.totalorder %s16, 0
    %p89 = por %p87, %p88
    %s91 = sadd.s32 %s90, 1
    %p94 = scmp.eq.s32.totalorder %s10, 1
    %p95 = scmp.ne.s32.totalorder %s90, %s92
    %p96 = scmp.eq.s32.totalorder %s10, 0
    %p97 = por %p95, %p96
    %p98 = scmp.ne.s32.totalorder %s90, %s92
    %p99 = scmp.eq.s32.totalorder %s15, 1
    %p100 = por %p98, %p99
    %p101 = scmp.ne.s32.totalorder %s92, %s93
    %p102 = scmp.eq.s32.totalorder %s15, 0
    %p103 = por %p101, %p102
    %p104 = scmp.ne.s32.totalorder %s92, %s93
    %p105 = scmp.eq.s32.totalorder %s16, 1
    %p106 = por %p104, %p105
    %p108 = scmp.ne.s32.totalorder %s93, %s107
    %p109 = scmp.eq.s32.totalorder %s16, 0
    %p110 = por %p108, %p109
    %s112 = sadd.s32 %s111, 1
    %p115 = scmp.eq.s32.totalorder %s10, 1
    %p116 = scmp.ne.s32.totalorder %s111, %s113
    %p117 = scmp.eq.s32.totalorder %s10, 0
    %p118 = por %p116, %p117
    %p119 = scmp.ne.s32.totalorder %s111, %s113
    %p120 = scmp.eq.s32.totalorder %s15, 1
    %p121 = por %p119, %p120
    %p122 = scmp.ne.s32.totalorder %s113, %s114
    %p123 = scmp.eq.s32.totalorder %s15, 0
    %p124 = por %p122, %p123
    %p125 = scmp.ne.s32.totalorder %s113, %s114
    %p126 = scmp.eq.s32.totalorder %s16, 1
    %p127 = por %p125, %p126
    %p129 = scmp.ne.s32.totalorder %s114, %s128
    %p130 = scmp.eq.s32.totalorder %s16, 0
    %p131 = por %p129, %p130
    %s132 = ssub.s32 %s17, %s29
    %s133 = ssub.s32 %s18, %s25
    %s134 = sor.u32 %s132, %s133
    %p135 = scmp.eq.s32.totalorder %s134, 0
    %s137 = sadd.s32 %s136, 1
    %s138 = scalar_select %p135, %s136, %s137
    %p141 = pneg %p135
    %p142 = scmp.eq.s32.totalorder %s10, 1
    %p143 = por %p141, %p142
    %p144 = scmp.ne.s32.totalorder %s136, %s139
    %p145 = scmp.eq.s32.totalorder %s10, 0
    %p146 = por %p144, %p145
    %p147 = scmp.ne.s32.totalorder %s136, %s139
    %p148 = scmp.eq.s32.totalorder %s15, 1
    %p149 = por %p147, %p148
    %p150 = scmp.ne.s32.totalorder %s139, %s140
    %p151 = scmp.eq.s32.totalorder %s15, 0
    %p152 = por %p150, %p151
    %p153 = scmp.ne.s32.totalorder %s139, %s140
    %p154 = scmp.eq.s32.totalorder %s16, 1
    %p155 = por %p153, %p154
    %p157 = scmp.ne.s32.totalorder %s140, %s156
    %p158 = scmp.eq.s32.totalorder %s16, 0
    %p159 = por %p157, %p158
    %p160 = scmp.le.s32.totalorder 1, %s10
    %p161 = scmp.lt.s32.totalorder %s10, 3
    %p162 = pnand %p160, %p161
    %p163 = pneg %p162
    // Predicated region
    $region9: #{conv_block_forward.1} parent=5 // pred_check
      _
    $region10: #{conv_block_forward.1} parent=5 // pred_check_branch
      %165 = sbr.rel (%p162) target = $region12
    $region11: #{conv_block_forward.1} parent=5 // pred_region
      %s166 = ssub.s32 %s10, 1
      // Predicated region
      $region13: #{conv_block_forward.1} parent=11 // pred_check
        %p167 = pneg %p103
      $region14: #{conv_block_forward.1} parent=11 // pred_check_branch
        %169 = sbr.rel (%p167) target = $region16
      $region15: #{conv_block_forward.1} parent=11 // pred_region
        _
      $region16: #{conv_block_forward.1} parent=11 // pred_fallthru
        _
      // Predicated region
      $region17: #{conv_block_forward.1} parent=11 // pred_check
        %p170 = pneg %p124
      $region18: #{conv_block_forward.1} parent=11 // pred_check_branch
        %172 = sbr.rel (%p170) target = $region20
      $region19: #{conv_block_forward.1} parent=11 // pred_region
        _
      $region20: #{conv_block_forward.1} parent=11 // pred_fallthru
        _
    $region12: #{conv_block_forward.1} parent=5 // pred_fallthru
      _
    %p173 = scmp.lt.s32.totalorder %s10, 2
    // Predicated region
    $region21: #{conv_block_forward.1} parent=5 // pred_check
      %p174 = pneg %p173
    $region22: #{conv_block_forward.1} parent=5 // pred_check_branch
      %176 = sbr.rel (%p174) target = $region24
    $region23: #{conv_block_forward.1} parent=5 // pred_region
      // Predicated region
      $region25: #{conv_block_forward.1} parent=23 // pred_check
        %p177 = pneg %p44
      $region26: #{conv_block_forward.1} parent=23 // pred_check_branch
        %179 = sbr.rel (%p177) target = $region28
      $region27: #{conv_block_forward.1} parent=23 // pred_region
        %s180 = smul.u32 30, %s18
        %s181 = ssub.s32 35, %s180
        %p182 = scmp.lt.s32.totalorder %s181, 30
        %s183 = scalar_select %p182, %s181, 30
        %s184 = smul.u32 128, %s183
        %p185 = scmp.lt.s32.totalorder %s17, 1
        %s186 = scalar_select %p185, %s17, 1
        %p187 = scmp.lt.s32.totalorder %s180, 34
        %s188 = scalar_select %p187, %s180, 34
        %s189 = smul.addr %s186, 35
        %s190 = sadd.s32 %s188, %s189
        %s191 = smul.addr %s190, 8
        %s192 = scalar_lea.vmem %s0, %s191
        %s193 = smul.u32 30, %s18
        %s194 = ssub.s32 35, %s193
        %p195 = scmp.lt.s32.totalorder %s194, 30
        %s196 = scalar_select %p195, %s194, 30
        %s197 = smul.u32 128, %s196
      $region28: #{conv_block_forward.1} parent=23 // pred_fallthru
        _
      // Predicated region
      $region29: #{conv_block_forward.1} parent=23 // pred_check
        %p198 = pneg %p76
      $region30: #{conv_block_forward.1} parent=23 // pred_check_branch
        %200 = sbr.rel (%p198) target = $region32
      $region31: #{conv_block_forward.1} parent=23 // pred_region
        %s201 = sadd.s32 %s18, 1
        %s202 = smul.u32 %s201, 6
        %s203 = smul.u32 5, %s202
        %p204 = scmp.lt.s32.totalorder %s17, 1
        %s205 = scalar_select %p204, %s17, 1
        %p206 = scmp.lt.s32.totalorder %s203, 34
        %s207 = scalar_select %p206, %s203, 34
        %s208 = smul.addr %s205, 35
        %s209 = sadd.s32 %s207, %s208
        %s210 = smul.addr %s209, 8
        %s211 = scalar_lea.vmem %s1, %s210
        %s212 = sadd.s32 %s18, 1
        %s213 = smul.u32 %s212, 6
        %s214 = smul.u32 5, %s213
      $region32: #{conv_block_forward.1} parent=23 // pred_fallthru
        _
    $region24: #{conv_block_forward.1} parent=5 // pred_fallthru
      _
    %p215 = scmp.le.s32.totalorder 1, %s10
    %p216 = scmp.lt.s32.totalorder %s10, 3
    %p217 = pnand %p215, %p216
    %p218 = pneg %p217
    // Predicated region
    $region33: #{conv_block_forward.1} parent=5 // pred_check
      _
    $region34: #{conv_block_forward.1} parent=5 // pred_check_branch
      %220 = sbr.rel (%p217) target = $region36
    $region35: #{conv_block_forward.1} parent=5 // pred_region
      %s221 = ssub.s32 %s10, 1
      %s222 = smul.u32 30, %s20
      %s223 = ssub.s32 35, %s222
      %p224 = scmp.lt.s32.totalorder %s223, 30
      %s225 = scalar_select %p224, %s223, 30
      %s226 = smul.u32 128, %s225
      %p227 = scmp.lt.s32.totalorder %s19, 1
      %s228 = scalar_select %p227, %s19, 1
      %p229 = scmp.lt.s32.totalorder %s222, 34
      %s230 = scalar_select %p229, %s222, 34
      %s231 = smul.addr %s228, 35
      %s232 = sadd.s32 %s230, %s231
      %s233 = smul.addr %s232, 8
      %s234 = scalar_lea.vmem %s0, %s233
      %p235 = pneg %p50
      %p236 = pneg %p47
      %s237 = sadd.s32 %s20, 1
      %s238 = smul.u32 %s237, 6
      %s239 = smul.u32 5, %s238
      %p240 = scmp.lt.s32.totalorder %s19, 1
      %s241 = scalar_select %p240, %s19, 1
      %p242 = scmp.lt.s32.totalorder %s239, 34
      %s243 = scalar_select %p242, %s239, 34
      %s244 = smul.addr %s241, 35
      %s245 = sadd.s32 %s243, %s244
      %s246 = smul.addr %s245, 8
      %s247 = scalar_lea.vmem %s1, %s246
      %p248 = pneg %p82
      %p249 = pneg %p79
      %p250 = pneg %p103
      %p251 = pneg %p100
      %p252 = pneg %p124
      %p253 = pneg %p121
      %p254 = pneg %p152
      %p255 = pneg %p149
      %s256 = smul.u32 2, %s20
      %p257 = scmp.lt.s32.totalorder %s19, 1
      %s258 = scalar_select %p257, %s19, 1
      %p259 = scmp.lt.s32.totalorder %s256, 1
      %s260 = scalar_select %p259, %s256, 1
      %s261 = smul.addr %s258, 2
      %s262 = sadd.s32 %s260, %s261
      %s263 = smul.addr %s262, 8
      %s264 = scalar_lea.vmem %s4, %s263
      %s265 = smul.u32 30, %s20
      %s266 = ssub.s32 35, %s265
      %p267 = scmp.lt.s32.totalorder %s266, 30
      %s268 = scalar_select %p267, %s266, 30
      %s269 = smul.u32 128, %s268
      %p270 = scmp.lt.s32.totalorder %s19, 1
      %s271 = scalar_select %p270, %s19, 1
      %p272 = scmp.lt.s32.totalorder %s265, 34
      %s273 = scalar_select %p272, %s265, 34
      %s274 = smul.addr %s271, 35
      %s275 = sadd.s32 %s273, %s274
      %s276 = smul.addr %s275, 8
      %s277 = scalar_lea.vmem %s0, %s276
      %s278 = smul.u32 30, %s20
      %s279 = ssub.s32 35, %s278
      %p280 = scmp.lt.s32.totalorder %s279, 30
      %s281 = scalar_select %p280, %s279, 30
      %s282 = smul.u32 128, %s281
      %s283 = sadd.s32 %s20, 1
      %s284 = smul.u32 %s283, 6
      %s285 = smul.u32 5, %s284
      %p286 = scmp.lt.s32.totalorder %s19, 1
      %s287 = scalar_select %p286, %s19, 1
      %p288 = scmp.lt.s32.totalorder %s285, 34
      %s289 = scalar_select %p288, %s285, 34
      %s290 = smul.addr %s287, 35
      %s291 = sadd.s32 %s289, %s290
      %s292 = smul.addr %s291, 8
      %s293 = scalar_lea.vmem %s1, %s292
      %s294 = sadd.s32 %s20, 1
      %s295 = smul.u32 %s294, 6
      %s296 = smul.u32 5, %s295
      %s297 = smul.u32 2, %s20
      %p298 = scmp.lt.s32.totalorder %s19, 1
      %s299 = scalar_select %p298, %s19, 1
      %p300 = scmp.lt.s32.totalorder %s297, 1
      %s301 = scalar_select %p300, %s297, 1
      %s302 = smul.addr %s299, 2
      %s303 = sadd.s32 %s301, %s302
      %s304 = smul.addr %s303, 8
      %s305 = scalar_lea.vmem %s4, %s304
      %s306 = smul.u32 2, %s20
      %v307 = vld [vmem:[%s277] sm:$0xff]
      %v308 = vld [vmem:[%s277 + $0x8] sm:$0xff]
      %v309 = vld [vmem:[%s277 + $0x10] sm:$0xff]
      %v310 = vld [vmem:[%s277 + $0x18] sm:$0xff]
      %v311 = vld [vmem:[%s277 + $0x20] sm:$0xff]
      %v312 = vld [vmem:[%s277 + $0x28] sm:$0xff]
      %v313 = vld [vmem:[%s277 + $0x30] sm:$0xff]
      %v314 = vld [vmem:[%s277 + $0x38] sm:$0xff]
      %v315 = vld [vmem:[%s277 + $0x40] sm:$0xff]
      %v316 = vld [vmem:[%s277 + $0x48] sm:$0xff]
      %v317 = vld [vmem:[%s277 + $0x50] sm:$0xff]
      %v318 = vld [vmem:[%s277 + $0x58] sm:$0xff]
      %v319 = vld [vmem:[%s277 + $0x60] sm:$0xff]
      %v320 = vld [vmem:[%s277 + $0x68] sm:$0xff]
      %v321 = vld [vmem:[%s277 + $0x70] sm:$0xff]
      %v322 = vld [vmem:[%s277 + $0x78] sm:$0xff]
      %v323 = vld [vmem:[%s277 + $0x80] sm:$0xff]
      %v324 = vld [vmem:[%s277 + $0x88] sm:$0xff]
      %v325 = vld [vmem:[%s277 + $0x90] sm:$0xff]
      %v326 = vld [vmem:[%s277 + $0x98] sm:$0xff]
      %v327 = vld [vmem:[%s277 + $0xa0] sm:$0xff]
      %v328 = vld [vmem:[%s277 + $0xa8] sm:$0xff]
      %v329 = vld [vmem:[%s277 + $0xb0] sm:$0xff]
      %v330 = vld [vmem:[%s277 + $0xb8] sm:$0xff]
      %v331 = vld [vmem:[%s277 + $0xc0] sm:$0xff]
      %v332 = vld [vmem:[%s277 + $0xc8] sm:$0xff]
      %v333 = vld [vmem:[%s277 + $0xd0] sm:$0xff]
      %v334 = vld [vmem:[%s277 + $0xd8] sm:$0xff]
      %v335 = vld [vmem:[%s277 + $0xe0] sm:$0xff]
      %v336 = vld [vmem:[%s277 + $0xe8] sm:$0xff]
      %vm337 = vcmask 31744
      %338 = vst.msk [vmem:[#allocation2] sm:$0xff] %vm337, %v307
      %339 = vst.msk [vmem:[#allocation2 + $0x8] sm:$0xff] %vm337, %v308
      %340 = vst.msk [vmem:[#allocation2 + $0x10] sm:$0xff] %vm337, %v309
      %341 = vst.msk [vmem:[#allocation2 + $0x18] sm:$0xff] %vm337, %v310
      %342 = vst.msk [vmem:[#allocation2 + $0x20] sm:$0xff] %vm337, %v311
      %343 = vst.msk [vmem:[#allocation2 + $0x28] sm:$0xff] %vm337, %v312
      %344 = vst.msk [vmem:[#allocation2 + $0x30] sm:$0xff] %vm337, %v313
      %345 = vst.msk [vmem:[#allocation2 + $0x38] sm:$0xff] %vm337, %v314
      %346 = vst.msk [vmem:[#allocation2 + $0x40] sm:$0xff] %vm337, %v315
      %347 = vst.msk [vmem:[#allocation2 + $0x48] sm:$0xff] %vm337, %v316
      %348 = vst.msk [vmem:[#allocation2 + $0x50] sm:$0xff] %vm337, %v317
      %349 = vst.msk [vmem:[#allocation2 + $0x58] sm:$0xff] %vm337, %v318
      %350 = vst.msk [vmem:[#allocation2 + $0x60] sm:$0xff] %vm337, %v319
      %351 = vst.msk [vmem:[#allocation2 + $0x68] sm:$0xff] %vm337, %v320
      %352 = vst.msk [vmem:[#allocation2 + $0x70] sm:$0xff] %vm337, %v321
      %353 = vst.msk [vmem:[#allocation2 + $0x78] sm:$0xff] %vm337, %v322
      %354 = vst.msk [vmem:[#allocation2 + $0x80] sm:$0xff] %vm337, %v323
      %355 = vst.msk [vmem:[#allocation2 + $0x88] sm:$0xff] %vm337, %v324
      %356 = vst.msk [vmem:[#allocation2 + $0x90] sm:$0xff] %vm337, %v325
      %357 = vst.msk [vmem:[#allocation2 + $0x98] sm:$0xff] %vm337, %v326
      %358 = vst.msk [vmem:[#allocation2 + $0xa0] sm:$0xff] %vm337, %v327
      %359 = vst.msk [vmem:[#allocation2 + $0xa8] sm:$0xff] %vm337, %v328
      %360 = vst.msk [vmem:[#allocation2 + $0xb0] sm:$0xff] %vm337, %v329
      %361 = vst.msk [vmem:[#allocation2 + $0xb8] sm:$0xff] %vm337, %v330
      %362 = vst.msk [vmem:[#allocation2 + $0xc0] sm:$0xff] %vm337, %v331
      %363 = vst.msk [vmem:[#allocation2 + $0xc8] sm:$0xff] %vm337, %v332
      %364 = vst.msk [vmem:[#allocation2 + $0xd0] sm:$0xff] %vm337, %v333
      %365 = vst.msk [vmem:[#allocation2 + $0xd8] sm:$0xff] %vm337, %v334
      %366 = vst.msk [vmem:[#allocation2 + $0xe0] sm:$0xff] %vm337, %v335
      %367 = vst.msk [vmem:[#allocation2 + $0xe8] sm:$0xff] %vm337, %v336
      %v368 = vld [vmem:[%s293] sm:$0xff]
      %v369 = vld [vmem:[%s293 + $0x8] sm:$0xff]
      %v370 = vld [vmem:[%s293 + $0x10] sm:$0xff]
      %v371 = vld [vmem:[%s293 + $0x18] sm:$0xff]
      %v372 = vld [vmem:[%s293 + $0x20] sm:$0xff]
      %373 = vst.msk [vmem:[#allocation2 + $0xf0] sm:$0xff] %vm337, %v368
      %374 = vst.msk [vmem:[#allocation2 + $0xf8] sm:$0xff] %vm337, %v369
      %375 = vst.msk [vmem:[#allocation2 + $0x100] sm:$0xff] %vm337, %v370
      %376 = vst.msk [vmem:[#allocation2 + $0x108] sm:$0xff] %vm337, %v371
      %377 = vst.msk [vmem:[#allocation2 + $0x110] sm:$0xff] %vm337, %v372
      %v378 = vld [vmem:[#allocation2] sm:$0xff]
      %v379 = vld [vmem:[#allocation2 + $0x8] sm:$0xff]
      %v380 = vld [vmem:[#allocation2 + $0x10] sm:$0xff]
      %v381 = vld [vmem:[#allocation2 + $0x18] sm:$0xff]
      %v382 = vld [vmem:[#allocation2 + $0x20] sm:$0xff]
      %v383 = vld [vmem:[#allocation2 + $0x28] sm:$0xff]
      %v384 = vld [vmem:[#allocation2 + $0x30] sm:$0xff]
      %v385 = vld [vmem:[#allocation2 + $0x38] sm:$0xff]
      %v386 = vld [vmem:[#allocation2 + $0x40] sm:$0xff]
      %v387 = vld [vmem:[#allocation2 + $0x48] sm:$0xff]
      %v388 = vld [vmem:[#allocation2 + $0x50] sm:$0xff]
      %v389 = vld [vmem:[#allocation2 + $0x58] sm:$0xff]
      %v390 = vld [vmem:[#allocation2 + $0x60] sm:$0xff]
      %v391 = vld [vmem:[#allocation2 + $0x68] sm:$0xff]
      %v392 = vld [vmem:[#allocation2 + $0x70] sm:$0xff]
      %v393 = vld [vmem:[#allocation2 + $0x78] sm:$0xff]
      %v394 = vld [vmem:[#allocation2 + $0x80] sm:$0xff]
      %v395 = vld [vmem:[#allocation2 + $0x88] sm:$0xff]
      %v396 = vld [vmem:[#allocation2 + $0x90] sm:$0xff]
      %v397 = vld [vmem:[#allocation2 + $0x98] sm:$0xff]
      %v398 = vld [vmem:[#allocation2 + $0xa0] sm:$0xff]
      %v399 = vld [vmem:[#allocation2 + $0xa8] sm:$0xff]
      %v400 = vld [vmem:[#allocation2 + $0xb0] sm:$0xff]
      %v401 = vld [vmem:[#allocation2 + $0xb8] sm:$0xff]
      %v402 = vld [vmem:[#allocation2 + $0xc0] sm:$0xff]
      %v403 = vld [vmem:[#allocation2 + $0xc8] sm:$0xff]
      %v404 = vld [vmem:[#allocation2 + $0xd0] sm:$0xff]
      %v405 = vld [vmem:[#allocation2 + $0xd8] sm:$0xff]
      %v406 = vld [vmem:[#allocation2 + $0xe0] sm:$0xff]
      %v407 = vld [vmem:[#allocation2 + $0xe8] sm:$0xff]
      %v408 = vld [vmem:[#allocation2 + $0x1] sm:$0xff]
      %v409 = vld [vmem:[#allocation2 + $0x9] sm:$0xff]
      %v410 = vld [vmem:[#allocation2 + $0x11] sm:$0xff]
      %v411 = vld [vmem:[#allocation2 + $0x19] sm:$0xff]
      %v412 = vld [vmem:[#allocation2 + $0x21] sm:$0xff]
      %v413 = vld [vmem:[#allocation2 + $0x29] sm:$0xff]
      %v414 = vld [vmem:[#allocation2 + $0x31] sm:$0xff]
      %v415 = vld [vmem:[#allocation2 + $0x39] sm:$0xff]
      %v416 = vld [vmem:[#allocation2 + $0x41] sm:$0xff]
      %v417 = vld [vmem:[#allocation2 + $0x49] sm:$0xff]
      %v418 = vld [vmem:[#allocation2 + $0x51] sm:$0xff]
      %v419 = vld [vmem:[#allocation2 + $0x59] sm:$0xff]
      %v420 = vld [vmem:[#allocation2 + $0x61] sm:$0xff]
      %v421 = vld [vmem:[#allocation2 + $0x69] sm:$0xff]
      %v422 = vld [vmem:[#allocation2 + $0x71] sm:$0xff]
      %v423 = vld [vmem:[#allocation2 + $0x79] sm:$0xff]
      %v424 = vld [vmem:[#allocation2 + $0x81] sm:$0xff]
      %v425 = vld [vmem:[#allocation2 + $0x89] sm:$0xff]
      %v426 = vld [vmem:[#allocation2 + $0x91] sm:$0xff]
      %v427 = vld [vmem:[#allocation2 + $0x99] sm:$0xff]
      %v428 = vld [vmem:[#allocation2 + $0xa1] sm:$0xff]
      %v429 = vld [vmem:[#allocation2 + $0xa9] sm:$0xff]
      %v430 = vld [vmem:[#allocation2 + $0xb1] sm:$0xff]
      %v431 = vld [vmem:[#allocation2 + $0xb9] sm:$0xff]
      %v432 = vld [vmem:[#allocation2 + $0xc1] sm:$0xff]
      %v433 = vld [vmem:[#allocation2 + $0xc9] sm:$0xff]
      %v434 = vld [vmem:[#allocation2 + $0xd1] sm:$0xff]
      %v435 = vld [vmem:[#allocation2 + $0xd9] sm:$0xff]
      %v436 = vld [vmem:[#allocation2 + $0xe1] sm:$0xff]
      %v437 = vld [vmem:[#allocation2 + $0xe9] sm:$0xff]
      %v438 = vld [vmem:[#allocation2 + $0x2] sm:$0xff]
      %v439 = vld [vmem:[#allocation2 + $0xa] sm:$0xff]
      %v440 = vld [vmem:[#allocation2 + $0x12] sm:$0xff]
      %v441 = vld [vmem:[#allocation2 + $0x1a] sm:$0xff]
      %v442 = vld [vmem:[#allocation2 + $0x22] sm:$0xff]
      %v443 = vld [vmem:[#allocation2 + $0x2a] sm:$0xff]
      %v444 = vld [vmem:[#allocation2 + $0x32] sm:$0xff]
      %v445 = vld [vmem:[#allocation2 + $0x3a] sm:$0xff]
      %v446 = vld [vmem:[#allocation2 + $0x42] sm:$0xff]
      %v447 = vld [vmem:[#allocation2 + $0x4a] sm:$0xff]
      %v448 = vld [vmem:[#allocation2 + $0x52] sm:$0xff]
      %v449 = vld [vmem:[#allocation2 + $0x5a] sm:$0xff]
      %v450 = vld [vmem:[#allocation2 + $0x62] sm:$0xff]
      %v451 = vld [vmem:[#allocation2 + $0x6a] sm:$0xff]
      %v452 = vld [vmem:[#allocation2 + $0x72] sm:$0xff]
      %v453 = vld [vmem:[#allocation2 + $0x7a] sm:$0xff]
      %v454 = vld [vmem:[#allocation2 + $0x82] sm:$0xff]
      %v455 = vld [vmem:[#allocation2 + $0x8a] sm:$0xff]
      %v456 = vld [vmem:[#allocation2 + $0x92] sm:$0xff]
      %v457 = vld [vmem:[#allocation2 + $0x9a] sm:$0xff]
      %v458 = vld [vmem:[#allocation2 + $0xa2] sm:$0xff]
      %v459 = vld [vmem:[#allocation2 + $0xaa] sm:$0xff]
      %v460 = vld [vmem:[#allocation2 + $0xb2] sm:$0xff]
      %v461 = vld [vmem:[#allocation2 + $0xba] sm:$0xff]
      %v462 = vld [vmem:[#allocation2 + $0xc2] sm:$0xff]
      %v463 = vld [vmem:[#allocation2 + $0xca] sm:$0xff]
      %v464 = vld [vmem:[#allocation2 + $0xd2] sm:$0xff]
      %v465 = vld [vmem:[#allocation2 + $0xda] sm:$0xff]
      %v466 = vld [vmem:[#allocation2 + $0xe2] sm:$0xff]
      %v467 = vld [vmem:[#allocation2 + $0xea] sm:$0xff]
      %v468 = vld [vmem:[#allocation2 + $0xf0] sm:$0xff]
      %v469 = vld [vmem:[#allocation2 + $0xf8] sm:$0xff]
      %v470 = vld [vmem:[#allocation2 + $0xf1] sm:$0xff]
      %v471 = vld [vmem:[#allocation2 + $0xf9] sm:$0xff]
      %v472 = vld [vmem:[#allocation2 + $0xf2] sm:$0xff]
      %v473 = vld [vmem:[#allocation2 + $0xfa] sm:$0xff]
      %v474 = vld [vmem:[#allocation2 + $0x100] sm:$0xff]
      %v475 = vld [vmem:[#allocation2 + $0x108] sm:$0xff]
      %v476 = vld [vmem:[#allocation2 + $0x101] sm:$0xff]
      %v477 = vld [vmem:[#allocation2 + $0x109] sm:$0xff]
      %v478 = vld [vmem:[#allocation2 + $0x102] sm:$0xff]
      %v479 = vld [vmem:[#allocation2 + $0x10a] sm:$0xff]
      %510 = vrot.lane.b32.xlu0 %v408, 4
      %v511 = vpop.permute.xlu0 %510
      %512 = vrot.lane.b32.xlu0 %v409, 4
      %v513 = vpop.permute.xlu0 %512
      %514 = vrot.lane.b32.xlu0 %v410, 4
      %v515 = vpop.permute.xlu0 %514
      %516 = vrot.lane.b32.xlu0 %v411, 4
      %v517 = vpop.permute.xlu0 %516
      %518 = vrot.lane.b32.xlu0 %v412, 4
      %v519 = vpop.permute.xlu0 %518
      %520 = vrot.lane.b32.xlu0 %v413, 4
      %v521 = vpop.permute.xlu0 %520
      %522 = vrot.lane.b32.xlu0 %v414, 4
      %v523 = vpop.permute.xlu0 %522
      %524 = vrot.lane.b32.xlu0 %v415, 4
      %v525 = vpop.permute.xlu0 %524
      %526 = vrot.lane.b32.xlu0 %v416, 4
      %v527 = vpop.permute.xlu0 %526
      %528 = vrot.lane.b32.xlu0 %v417, 4
      %v529 = vpop.permute.xlu0 %528
      %530 = vrot.lane.b32.xlu0 %v418, 4
      %v531 = vpop.permute.xlu0 %530
      %532 = vrot.lane.b32.xlu0 %v419, 4
      %v533 = vpop.permute.xlu0 %532
      %534 = vrot.lane.b32.xlu0 %v420, 4
      %v535 = vpop.permute.xlu0 %534
      %536 = vrot.lane.b32.xlu0 %v421, 4
      %v537 = vpop.permute.xlu0 %536
      %538 = vrot.lane.b32.xlu0 %v422, 4
      %v539 = vpop.permute.xlu0 %538
      %540 = vrot.lane.b32.xlu0 %v423, 4
      %v541 = vpop.permute.xlu0 %540
      %542 = vrot.lane.b32.xlu0 %v424, 4
      %v543 = vpop.permute.xlu0 %542
      %544 = vrot.lane.b32.xlu0 %v425, 4
      %v545 = vpop.permute.xlu0 %544
      %546 = vrot.lane.b32.xlu0 %v426, 4
      %v547 = vpop.permute.xlu0 %546
      %548 = vrot.lane.b32.xlu0 %v427, 4
      %v549 = vpop.permute.xlu0 %548
      %550 = vrot.lane.b32.xlu0 %v428, 4
      %v551 = vpop.permute.xlu0 %550
      %552 = vrot.lane.b32.xlu0 %v429, 4
      %v553 = vpop.permute.xlu0 %552
      %554 = vrot.lane.b32.xlu0 %v430, 4
      %v555 = vpop.permute.xlu0 %554
      %556 = vrot.lane.b32.xlu0 %v431, 4
      %v557 = vpop.permute.xlu0 %556
      %558 = vrot.lane.b32.xlu0 %v432, 4
      %v559 = vpop.permute.xlu0 %558
      %560 = vrot.lane.b32.xlu0 %v433, 4
      %v561 = vpop.permute.xlu0 %560
      %562 = vrot.lane.b32.xlu0 %v434, 4
      %v563 = vpop.permute.xlu0 %562
      %564 = vrot.lane.b32.xlu0 %v435, 4
      %v565 = vpop.permute.xlu0 %564
      %566 = vrot.lane.b32.xlu0 %v436, 4
      %v567 = vpop.permute.xlu0 %566
      %568 = vrot.lane.b32.xlu0 %v437, 4
      %v569 = vpop.permute.xlu0 %568
      %630 = vrot.lane.b32.xlu0 %v438, 8
      %v631 = vpop.permute.xlu0 %630
      %632 = vrot.lane.b32.xlu0 %v439, 8
      %v633 = vpop.permute.xlu0 %632
      %634 = vrot.lane.b32.xlu0 %v440, 8
      %v635 = vpop.permute.xlu0 %634
      %636 = vrot.lane.b32.xlu0 %v441, 8
      %v637 = vpop.permute.xlu0 %636
      %638 = vrot.lane.b32.xlu0 %v442, 8
      %v639 = vpop.permute.xlu0 %638
      %640 = vrot.lane.b32.xlu0 %v443, 8
      %v641 = vpop.permute.xlu0 %640
      %642 = vrot.lane.b32.xlu0 %v444, 8
      %v643 = vpop.permute.xlu0 %642
      %644 = vrot.lane.b32.xlu0 %v445, 8
      %v645 = vpop.permute.xlu0 %644
      %646 = vrot.lane.b32.xlu0 %v446, 8
      %v647 = vpop.permute.xlu0 %646
      %648 = vrot.lane.b32.xlu0 %v447, 8
      %v649 = vpop.permute.xlu0 %648
      %650 = vrot.lane.b32.xlu0 %v448, 8
      %v651 = vpop.permute.xlu0 %650
      %652 = vrot.lane.b32.xlu0 %v449, 8
      %v653 = vpop.permute.xlu0 %652
      %654 = vrot.lane.b32.xlu0 %v450, 8
      %v655 = vpop.permute.xlu0 %654
      %656 = vrot.lane.b32.xlu0 %v451, 8
      %v657 = vpop.permute.xlu0 %656
      %658 = vrot.lane.b32.xlu0 %v452, 8
      %v659 = vpop.permute.xlu0 %658
      %660 = vrot.lane.b32.xlu0 %v453, 8
      %v661 = vpop.permute.xlu0 %660
      %662 = vrot.lane.b32.xlu0 %v454, 8
      %v663 = vpop.permute.xlu0 %662
      %664 = vrot.lane.b32.xlu0 %v455, 8
      %v665 = vpop.permute.xlu0 %664
      %666 = vrot.lane.b32.xlu0 %v456, 8
      %v667 = vpop.permute.xlu0 %666
      %668 = vrot.lane.b32.xlu0 %v457, 8
      %v669 = vpop.permute.xlu0 %668
      %670 = vrot.lane.b32.xlu0 %v458, 8
      %v671 = vpop.permute.xlu0 %670
      %672 = vrot.lane.b32.xlu0 %v459, 8
      %v673 = vpop.permute.xlu0 %672
      %674 = vrot.lane.b32.xlu0 %v460, 8
      %v675 = vpop.permute.xlu0 %674
      %676 = vrot.lane.b32.xlu0 %v461, 8
      %v677 = vpop.permute.xlu0 %676
      %678 = vrot.lane.b32.xlu0 %v462, 8
      %v679 = vpop.permute.xlu0 %678
      %680 = vrot.lane.b32.xlu0 %v463, 8
      %v681 = vpop.permute.xlu0 %680
      %682 = vrot.lane.b32.xlu0 %v464, 8
      %v683 = vpop.permute.xlu0 %682
      %684 = vrot.lane.b32.xlu0 %v465, 8
      %v685 = vpop.permute.xlu0 %684
      %686 = vrot.lane.b32.xlu0 %v466, 8
      %v687 = vpop.permute.xlu0 %686
      %688 = vrot.lane.b32.xlu0 %v467, 8
      %v689 = vpop.permute.xlu0 %688
      %750 = vrot.lane.b32.xlu0 %v380, 12
      %v751 = vpop.permute.xlu0 %750
      %752 = vrot.lane.b32.xlu0 %v381, 12
      %v753 = vpop.permute.xlu0 %752
      %754 = vrot.lane.b32.xlu0 %v382, 12
      %v755 = vpop.permute.xlu0 %754
      %756 = vrot.lane.b32.xlu0 %v383, 12
      %v757 = vpop.permute.xlu0 %756
      %758 = vrot.lane.b32.xlu0 %v384, 12
      %v759 = vpop.permute.xlu0 %758
      %760 = vrot.lane.b32.xlu0 %v385, 12
      %v761 = vpop.permute.xlu0 %760
      %762 = vrot.lane.b32.xlu0 %v386, 12
      %v763 = vpop.permute.xlu0 %762
      %764 = vrot.lane.b32.xlu0 %v387, 12
      %v765 = vpop.permute.xlu0 %764
      %766 = vrot.lane.b32.xlu0 %v388, 12
      %v767 = vpop.permute.xlu0 %766
      %768 = vrot.lane.b32.xlu0 %v389, 12
      %v769 = vpop.permute.xlu0 %768
      %770 = vrot.lane.b32.xlu0 %v390, 12
      %v771 = vpop.permute.xlu0 %770
      %772 = vrot.lane.b32.xlu0 %v391, 12
      %v773 = vpop.permute.xlu0 %772
      %774 = vrot.lane.b32.xlu0 %v392, 12
      %v775 = vpop.permute.xlu0 %774
      %776 = vrot.lane.b32.xlu0 %v393, 12
      %v777 = vpop.permute.xlu0 %776
      %778 = vrot.lane.b32.xlu0 %v394, 12
      %v779 = vpop.permute.xlu0 %778
      %780 = vrot.lane.b32.xlu0 %v395, 12
      %v781 = vpop.permute.xlu0 %780
      %782 = vrot.lane.b32.xlu0 %v396, 12
      %v783 = vpop.permute.xlu0 %782
      %784 = vrot.lane.b32.xlu0 %v397, 12
      %v785 = vpop.permute.xlu0 %784
      %786 = vrot.lane.b32.xlu0 %v398, 12
      %v787 = vpop.permute.xlu0 %786
      %788 = vrot.lane.b32.xlu0 %v399, 12
      %v789 = vpop.permute.xlu0 %788
      %790 = vrot.lane.b32.xlu0 %v400, 12
      %v791 = vpop.permute.xlu0 %790
      %792 = vrot.lane.b32.xlu0 %v401, 12
      %v793 = vpop.permute.xlu0 %792
      %794 = vrot.lane.b32.xlu0 %v402, 12
      %v795 = vpop.permute.xlu0 %794
      %796 = vrot.lane.b32.xlu0 %v403, 12
      %v797 = vpop.permute.xlu0 %796
      %798 = vrot.lane.b32.xlu0 %v404, 12
      %v799 = vpop.permute.xlu0 %798
      %800 = vrot.lane.b32.xlu0 %v405, 12
      %v801 = vpop.permute.xlu0 %800
      %802 = vrot.lane.b32.xlu0 %v406, 12
      %v803 = vpop.permute.xlu0 %802
      %804 = vrot.lane.b32.xlu0 %v407, 12
      %v805 = vpop.permute.xlu0 %804
      %806 = vrot.lane.b32.xlu0 %v468, 12
      %v807 = vpop.permute.xlu0 %806
      %808 = vrot.lane.b32.xlu0 %v469, 12
      %v809 = vpop.permute.xlu0 %808
      %842 = vrot.lane.b32.xlu0 %v410, 16
      %v843 = vpop.permute.xlu0 %842
      %844 = vrot.lane.b32.xlu0 %v411, 16
      %v845 = vpop.permute.xlu0 %844
      %846 = vrot.lane.b32.xlu0 %v412, 16
      %v847 = vpop.permute.xlu0 %846
      %848 = vrot.lane.b32.xlu0 %v413, 16
      %v849 = vpop.permute.xlu0 %848
      %850 = vrot.lane.b32.xlu0 %v414, 16
      %v851 = vpop.permute.xlu0 %850
      %852 = vrot.lane.b32.xlu0 %v415, 16
      %v853 = vpop.permute.xlu0 %852
      %854 = vrot.lane.b32.xlu0 %v416, 16
      %v855 = vpop.permute.xlu0 %854
      %856 = vrot.lane.b32.xlu0 %v417, 16
      %v857 = vpop.permute.xlu0 %856
      %858 = vrot.lane.b32.xlu0 %v418, 16
      %v859 = vpop.permute.xlu0 %858
      %860 = vrot.lane.b32.xlu0 %v419, 16
      %v861 = vpop.permute.xlu0 %860
      %862 = vrot.lane.b32.xlu0 %v420, 16
      %v863 = vpop.permute.xlu0 %862
      %864 = vrot.lane.b32.xlu0 %v421, 16
      %v865 = vpop.permute.xlu0 %864
      %866 = vrot.lane.b32.xlu0 %v422, 16
      %v867 = vpop.permute.xlu0 %866
      %868 = vrot.lane.b32.xlu0 %v423, 16
      %v869 = vpop.permute.xlu0 %868
      %870 = vrot.lane.b32.xlu0 %v424, 16
      %v871 = vpop.permute.xlu0 %870
      %872 = vrot.lane.b32.xlu0 %v425, 16
      %v873 = vpop.permute.xlu0 %872
      %874 = vrot.lane.b32.xlu0 %v426, 16
      %v875 = vpop.permute.xlu0 %874
      %876 = vrot.lane.b32.xlu0 %v427, 16
      %v877 = vpop.permute.xlu0 %876
      %878 = vrot.lane.b32.xlu0 %v428, 16
      %v879 = vpop.permute.xlu0 %878
      %880 = vrot.lane.b32.xlu0 %v429, 16
      %v881 = vpop.permute.xlu0 %880
      %882 = vrot.lane.b32.xlu0 %v430, 16
      %v883 = vpop.permute.xlu0 %882
      %884 = vrot.lane.b32.xlu0 %v431, 16
      %v885 = vpop.permute.xlu0 %884
      %886 = vrot.lane.b32.xlu0 %v432, 16
      %v887 = vpop.permute.xlu0 %886
      %888 = vrot.lane.b32.xlu0 %v433, 16
      %v889 = vpop.permute.xlu0 %888
      %890 = vrot.lane.b32.xlu0 %v434, 16
      %v891 = vpop.permute.xlu0 %890
      %892 = vrot.lane.b32.xlu0 %v435, 16
      %v893 = vpop.permute.xlu0 %892
      %894 = vrot.lane.b32.xlu0 %v436, 16
      %v895 = vpop.permute.xlu0 %894
      %896 = vrot.lane.b32.xlu0 %v437, 16
      %v897 = vpop.permute.xlu0 %896
      %898 = vrot.lane.b32.xlu0 %v470, 16
      %v899 = vpop.permute.xlu0 %898
      %900 = vrot.lane.b32.xlu0 %v471, 16
      %v901 = vpop.permute.xlu0 %900
      %934 = vrot.lane.b32.xlu0 %v440, 20
      %v935 = vpop.permute.xlu0 %934
      %936 = vrot.lane.b32.xlu0 %v441, 20
      %v937 = vpop.permute.xlu0 %936
      %938 = vrot.lane.b32.xlu0 %v442, 20
      %v939 = vpop.permute.xlu0 %938
      %940 = vrot.lane.b32.xlu0 %v443, 20
      %v941 = vpop.permute.xlu0 %940
      %942 = vrot.lane.b32.xlu0 %v444, 20
      %v943 = vpop.permute.xlu0 %942
      %944 = vrot.lane.b32.xlu0 %v445, 20
      %v945 = vpop.permute.xlu0 %944
      %946 = vrot.lane.b32.xlu0 %v446, 20
      %v947 = vpop.permute.xlu0 %946
      %948 = vrot.lane.b32.xlu0 %v447, 20
      %v949 = vpop.permute.xlu0 %948
      %950 = vrot.lane.b32.xlu0 %v448, 20
      %v951 = vpop.permute.xlu0 %950
      %952 = vrot.lane.b32.xlu0 %v449, 20
      %v953 = vpop.permute.xlu0 %952
      %954 = vrot.lane.b32.xlu0 %v450, 20
      %v955 = vpop.permute.xlu0 %954
      %956 = vrot.lane.b32.xlu0 %v451, 20
      %v957 = vpop.permute.xlu0 %956
      %958 = vrot.lane.b32.xlu0 %v452, 20
      %v959 = vpop.permute.xlu0 %958
      %960 = vrot.lane.b32.xlu0 %v453, 20
      %v961 = vpop.permute.xlu0 %960
      %962 = vrot.lane.b32.xlu0 %v454, 20
      %v963 = vpop.permute.xlu0 %962
      %964 = vrot.lane.b32.xlu0 %v455, 20
      %v965 = vpop.permute.xlu0 %964
      %966 = vrot.lane.b32.xlu0 %v456, 20
      %v967 = vpop.permute.xlu0 %966
      %968 = vrot.lane.b32.xlu0 %v457, 20
      %v969 = vpop.permute.xlu0 %968
      %970 = vrot.lane.b32.xlu0 %v458, 20
      %v971 = vpop.permute.xlu0 %970
      %972 = vrot.lane.b32.xlu0 %v459, 20
      %v973 = vpop.permute.xlu0 %972
      %974 = vrot.lane.b32.xlu0 %v460, 20
      %v975 = vpop.permute.xlu0 %974
      %976 = vrot.lane.b32.xlu0 %v461, 20
      %v977 = vpop.permute.xlu0 %976
      %978 = vrot.lane.b32.xlu0 %v462, 20
      %v979 = vpop.permute.xlu0 %978
      %980 = vrot.lane.b32.xlu0 %v463, 20
      %v981 = vpop.permute.xlu0 %980
      %982 = vrot.lane.b32.xlu0 %v464, 20
      %v983 = vpop.permute.xlu0 %982
      %984 = vrot.lane.b32.xlu0 %v465, 20
      %v985 = vpop.permute.xlu0 %984
      %986 = vrot.lane.b32.xlu0 %v466, 20
      %v987 = vpop.permute.xlu0 %986
      %988 = vrot.lane.b32.xlu0 %v467, 20
      %v989 = vpop.permute.xlu0 %988
      %990 = vrot.lane.b32.xlu0 %v472, 20
      %v991 = vpop.permute.xlu0 %990
      %992 = vrot.lane.b32.xlu0 %v473, 20
      %v993 = vpop.permute.xlu0 %992
      %1026 = vrot.lane.b32.xlu0 %v382, 24
      %v1027 = vpop.permute.xlu0 %1026
      %1028 = vrot.lane.b32.xlu0 %v383, 24
      %v1029 = vpop.permute.xlu0 %1028
      %1030 = vrot.lane.b32.xlu0 %v384, 24
      %v1031 = vpop.permute.xlu0 %1030
      %1032 = vrot.lane.b32.xlu0 %v385, 24
      %v1033 = vpop.permute.xlu0 %1032
      %1034 = vrot.lane.b32.xlu0 %v386, 24
      %v1035 = vpop.permute.xlu0 %1034
      %1036 = vrot.lane.b32.xlu0 %v387, 24
      %v1037 = vpop.permute.xlu0 %1036
      %1038 = vrot.lane.b32.xlu0 %v388, 24
      %v1039 = vpop.permute.xlu0 %1038
      %1040 = vrot.lane.b32.xlu0 %v389, 24
      %v1041 = vpop.permute.xlu0 %1040
      %1042 = vrot.lane.b32.xlu0 %v390, 24
      %v1043 = vpop.permute.xlu0 %1042
      %1044 = vrot.lane.b32.xlu0 %v391, 24
      %v1045 = vpop.permute.xlu0 %1044
      %1046 = vrot.lane.b32.xlu0 %v392, 24
      %v1047 = vpop.permute.xlu0 %1046
      %1048 = vrot.lane.b32.xlu0 %v393, 24
      %v1049 = vpop.permute.xlu0 %1048
      %1050 = vrot.lane.b32.xlu0 %v394, 24
      %v1051 = vpop.permute.xlu0 %1050
      %1052 = vrot.lane.b32.xlu0 %v395, 24
      %v1053 = vpop.permute.xlu0 %1052
      %1054 = vrot.lane.b32.xlu0 %v396, 24
      %v1055 = vpop.permute.xlu0 %1054
      %1056 = vrot.lane.b32.xlu0 %v397, 24
      %v1057 = vpop.permute.xlu0 %1056
      %1058 = vrot.lane.b32.xlu0 %v398, 24
      %v1059 = vpop.permute.xlu0 %1058
      %1060 = vrot.lane.b32.xlu0 %v399, 24
      %v1061 = vpop.permute.xlu0 %1060
      %1062 = vrot.lane.b32.xlu0 %v400, 24
      %v1063 = vpop.permute.xlu0 %1062
      %1064 = vrot.lane.b32.xlu0 %v401, 24
      %v1065 = vpop.permute.xlu0 %1064
      %1066 = vrot.lane.b32.xlu0 %v402, 24
      %v1067 = vpop.permute.xlu0 %1066
      %1068 = vrot.lane.b32.xlu0 %v403, 24
      %v1069 = vpop.permute.xlu0 %1068
      %1070 = vrot.lane.b32.xlu0 %v404, 24
      %v1071 = vpop.permute.xlu0 %1070
      %1072 = vrot.lane.b32.xlu0 %v405, 24
      %v1073 = vpop.permute.xlu0 %1072
      %1074 = vrot.lane.b32.xlu0 %v406, 24
      %v1075 = vpop.permute.xlu0 %1074
      %1076 = vrot.lane.b32.xlu0 %v407, 24
      %v1077 = vpop.permute.xlu0 %1076
      %1078 = vrot.lane.b32.xlu0 %v468, 24
      %v1079 = vpop.permute.xlu0 %1078
      %1080 = vrot.lane.b32.xlu0 %v469, 24
      %v1081 = vpop.permute.xlu0 %1080
      %1082 = vrot.lane.b32.xlu0 %v474, 24
      %v1083 = vpop.permute.xlu0 %1082
      %1084 = vrot.lane.b32.xlu0 %v475, 24
      %v1085 = vpop.permute.xlu0 %1084
      %1118 = vrot.lane.b32.xlu0 %v412, 28
      %v1119 = vpop.permute.xlu0 %1118
      %1120 = vrot.lane.b32.xlu0 %v413, 28
      %v1121 = vpop.permute.xlu0 %1120
      %1122 = vrot.lane.b32.xlu0 %v414, 28
      %v1123 = vpop.permute.xlu0 %1122
      %1124 = vrot.lane.b32.xlu0 %v415, 28
      %v1125 = vpop.permute.xlu0 %1124
      %1126 = vrot.lane.b32.xlu0 %v416, 28
      %v1127 = vpop.permute.xlu0 %1126
      %1128 = vrot.lane.b32.xlu0 %v417, 28
      %v1129 = vpop.permute.xlu0 %1128
      %1130 = vrot.lane.b32.xlu0 %v418, 28
      %v1131 = vpop.permute.xlu0 %1130
      %1132 = vrot.lane.b32.xlu0 %v419, 28
      %v1133 = vpop.permute.xlu0 %1132
      %1134 = vrot.lane.b32.xlu0 %v420, 28
      %v1135 = vpop.permute.xlu0 %1134
      %1136 = vrot.lane.b32.xlu0 %v421, 28
      %v1137 = vpop.permute.xlu0 %1136
      %1138 = vrot.lane.b32.xlu0 %v422, 28
      %v1139 = vpop.permute.xlu0 %1138
      %1140 = vrot.lane.b32.xlu0 %v423, 28
      %v1141 = vpop.permute.xlu0 %1140
      %1142 = vrot.lane.b32.xlu0 %v424, 28
      %v1143 = vpop.permute.xlu0 %1142
      %1144 = vrot.lane.b32.xlu0 %v425, 28
      %v1145 = vpop.permute.xlu0 %1144
      %1146 = vrot.lane.b32.xlu0 %v426, 28
      %v1147 = vpop.permute.xlu0 %1146
      %1148 = vrot.lane.b32.xlu0 %v427, 28
      %v1149 = vpop.permute.xlu0 %1148
      %1150 = vrot.lane.b32.xlu0 %v428, 28
      %v1151 = vpop.permute.xlu0 %1150
      %1152 = vrot.lane.b32.xlu0 %v429, 28
      %v1153 = vpop.permute.xlu0 %1152
      %1154 = vrot.lane.b32.xlu0 %v430, 28
      %v1155 = vpop.permute.xlu0 %1154
      %1156 = vrot.lane.b32.xlu0 %v431, 28
      %v1157 = vpop.permute.xlu0 %1156
      %1158 = vrot.lane.b32.xlu0 %v432, 28
      %v1159 = vpop.permute.xlu0 %1158
      %1160 = vrot.lane.b32.xlu0 %v433, 28
      %v1161 = vpop.permute.xlu0 %1160
      %1162 = vrot.lane.b32.xlu0 %v434, 28
      %v1163 = vpop.permute.xlu0 %1162
      %1164 = vrot.lane.b32.xlu0 %v435, 28
      %v1165 = vpop.permute.xlu0 %1164
      %1166 = vrot.lane.b32.xlu0 %v436, 28
      %v1167 = vpop.permute.xlu0 %1166
      %1168 = vrot.lane.b32.xlu0 %v437, 28
      %v1169 = vpop.permute.xlu0 %1168
      %1170 = vrot.lane.b32.xlu0 %v470, 28
      %v1171 = vpop.permute.xlu0 %1170
      %1172 = vrot.lane.b32.xlu0 %v471, 28
      %v1173 = vpop.permute.xlu0 %1172
      %1174 = vrot.lane.b32.xlu0 %v476, 28
      %v1175 = vpop.permute.xlu0 %1174
      %1176 = vrot.lane.b32.xlu0 %v477, 28
      %v1177 = vpop.permute.xlu0 %1176
      %1210 = vrot.lane.b32.xlu0 %v442, 32
      %v1211 = vpop.permute.xlu0 %1210
      %1212 = vrot.lane.b32.xlu0 %v443, 32
      %v1213 = vpop.permute.xlu0 %1212
      %1214 = vrot.lane.b32.xlu0 %v444, 32
      %v1215 = vpop.permute.xlu0 %1214
      %1216 = vrot.lane.b32.xlu0 %v445, 32
      %v1217 = vpop.permute.xlu0 %1216
      %1218 = vrot.lane.b32.xlu0 %v446, 32
      %v1219 = vpop.permute.xlu0 %1218
      %1220 = vrot.lane.b32.xlu0 %v447, 32
      %v1221 = vpop.permute.xlu0 %1220
      %1222 = vrot.lane.b32.xlu0 %v448, 32
      %v1223 = vpop.permute.xlu0 %1222
      %1224 = vrot.lane.b32.xlu0 %v449, 32
      %v1225 = vpop.permute.xlu0 %1224
      %1226 = vrot.lane.b32.xlu0 %v450, 32
      %v1227 = vpop.permute.xlu0 %1226
      %1228 = vrot.lane.b32.xlu0 %v451, 32
      %v1229 = vpop.permute.xlu0 %1228
      %1230 = vrot.lane.b32.xlu0 %v452, 32
      %v1231 = vpop.permute.xlu0 %1230
      %1232 = vrot.lane.b32.xlu0 %v453, 32
      %v1233 = vpop.permute.xlu0 %1232
      %1234 = vrot.lane.b32.xlu0 %v454, 32
      %v1235 = vpop.permute.xlu0 %1234
      %1236 = vrot.lane.b32.xlu0 %v455, 32
      %v1237 = vpop.permute.xlu0 %1236
      %1238 = vrot.lane.b32.xlu0 %v456, 32
      %v1239 = vpop.permute.xlu0 %1238
      %1240 = vrot.lane.b32.xlu0 %v457, 32
      %v1241 = vpop.permute.xlu0 %1240
      %1242 = vrot.lane.b32.xlu0 %v458, 32
      %v1243 = vpop.permute.xlu0 %1242
      %1244 = vrot.lane.b32.xlu0 %v459, 32
      %v1245 = vpop.permute.xlu0 %1244
      %1246 = vrot.lane.b32.xlu0 %v460, 32
      %v1247 = vpop.permute.xlu0 %1246
      %1248 = vrot.lane.b32.xlu0 %v461, 32
      %v1249 = vpop.permute.xlu0 %1248
      %1250 = vrot.lane.b32.xlu0 %v462, 32
      %v1251 = vpop.permute.xlu0 %1250
      %1252 = vrot.lane.b32.xlu0 %v463, 32
      %v1253 = vpop.permute.xlu0 %1252
      %1254 = vrot.lane.b32.xlu0 %v464, 32
      %v1255 = vpop.permute.xlu0 %1254
      %1256 = vrot.lane.b32.xlu0 %v465, 32
      %v1257 = vpop.permute.xlu0 %1256
      %1258 = vrot.lane.b32.xlu0 %v466, 32
      %v1259 = vpop.permute.xlu0 %1258
      %1260 = vrot.lane.b32.xlu0 %v467, 32
      %v1261 = vpop.permute.xlu0 %1260
      %1262 = vrot.lane.b32.xlu0 %v472, 32
      %v1263 = vpop.permute.xlu0 %1262
      %1264 = vrot.lane.b32.xlu0 %v473, 32
      %v1265 = vpop.permute.xlu0 %1264
      %1266 = vrot.lane.b32.xlu0 %v478, 32
      %v1267 = vpop.permute.xlu0 %1266
      %1268 = vrot.lane.b32.xlu0 %v479, 32
      %v1269 = vpop.permute.xlu0 %1268
      %v1300 = vsel %vm337, %v378, %v511
      %v1301 = vsel %vm337, %v379, %v513
      %v1302 = vsel %vm337, %v380, %v515
      %v1303 = vsel %vm337, %v381, %v517
      %v1304 = vsel %vm337, %v382, %v519
      %v1305 = vsel %vm337, %v383, %v521
      %v1306 = vsel %vm337, %v384, %v523
      %v1307 = vsel %vm337, %v385, %v525
      %v1308 = vsel %vm337, %v386, %v527
      %v1309 = vsel %vm337, %v387, %v529
      %v1310 = vsel %vm337, %v388, %v531
      %v1311 = vsel %vm337, %v389, %v533
      %v1312 = vsel %vm337, %v390, %v535
      %v1313 = vsel %vm337, %v391, %v537
      %v1314 = vsel %vm337, %v392, %v539
      %v1315 = vsel %vm337, %v393, %v541
      %v1316 = vsel %vm337, %v394, %v543
      %v1317 = vsel %vm337, %v395, %v545
      %v1318 = vsel %vm337, %v396, %v547
      %v1319 = vsel %vm337, %v397, %v549
      %v1320 = vsel %vm337, %v398, %v551
      %v1321 = vsel %vm337, %v399, %v553
      %v1322 = vsel %vm337, %v400, %v555
      %v1323 = vsel %vm337, %v401, %v557
      %v1324 = vsel %vm337, %v402, %v559
      %v1325 = vsel %vm337, %v403, %v561
      %v1326 = vsel %vm337, %v404, %v563
      %v1327 = vsel %vm337, %v405, %v565
      %v1328 = vsel %vm337, %v406, %v567
      %v1329 = vsel %vm337, %v407, %v569
      %vm1330 = vcmask 64512
      %v1331 = vsel %vm1330, %v1300, %v631
      %v1332 = vsel %vm1330, %v1301, %v633
      %v1333 = vsel %vm1330, %v1302, %v635
      %v1334 = vsel %vm1330, %v1303, %v637
      %v1335 = vsel %vm1330, %v1304, %v639
      %v1336 = vsel %vm1330, %v1305, %v641
      %v1337 = vsel %vm1330, %v1306, %v643
      %v1338 = vsel %vm1330, %v1307, %v645
      %v1339 = vsel %vm1330, %v1308, %v647
      %v1340 = vsel %vm1330, %v1309, %v649
      %v1341 = vsel %vm1330, %v1310, %v651
      %v1342 = vsel %vm1330, %v1311, %v653
      %v1343 = vsel %vm1330, %v1312, %v655
      %v1344 = vsel %vm1330, %v1313, %v657
      %v1345 = vsel %vm1330, %v1314, %v659
      %v1346 = vsel %vm1330, %v1315, %v661
      %v1347 = vsel %vm1330, %v1316, %v663
      %v1348 = vsel %vm1330, %v1317, %v665
      %v1349 = vsel %vm1330, %v1318, %v667
      %v1350 = vsel %vm1330, %v1319, %v669
      %v1351 = vsel %vm1330, %v1320, %v671
      %v1352 = vsel %vm1330, %v1321, %v673
      %v1353 = vsel %vm1330, %v1322, %v675
      %v1354 = vsel %vm1330, %v1323, %v677
      %v1355 = vsel %vm1330, %v1324, %v679
      %v1356 = vsel %vm1330, %v1325, %v681
      %v1357 = vsel %vm1330, %v1326, %v683
      %v1358 = vsel %vm1330, %v1327, %v685
      %v1359 = vsel %vm1330, %v1328, %v687
      %v1360 = vsel %vm1330, %v1329, %v689
      %vm1361 = vcmask 97280
      %v1362 = vsel %vm1361, %v1331, %v751
      %v1363 = vsel %vm1361, %v1332, %v753
      %v1364 = vsel %vm1361, %v1333, %v755
      %v1365 = vsel %vm1361, %v1334, %v757
      %v1366 = vsel %vm1361, %v1335, %v759
      %v1367 = vsel %vm1361, %v1336, %v761
      %v1368 = vsel %vm1361, %v1337, %v763
      %v1369 = vsel %vm1361, %v1338, %v765
      %v1370 = vsel %vm1361, %v1339, %v767
      %v1371 = vsel %vm1361, %v1340, %v769
      %v1372 = vsel %vm1361, %v1341, %v771
      %v1373 = vsel %vm1361, %v1342, %v773
      %v1374 = vsel %vm1361, %v1343, %v775
      %v1375 = vsel %vm1361, %v1344, %v777
      %v1376 = vsel %vm1361, %v1345, %v779
      %v1377 = vsel %vm1361, %v1346, %v781
      %v1378 = vsel %vm1361, %v1347, %v783
      %v1379 = vsel %vm1361, %v1348, %v785
      %v1380 = vsel %vm1361, %v1349, %v787
      %v1381 = vsel %vm1361, %v1350, %v789
      %v1382 = vsel %vm1361, %v1351, %v791
      %v1383 = vsel %vm1361, %v1352, %v793
      %v1384 = vsel %vm1361, %v1353, %v795
      %v1385 = vsel %vm1361, %v1354, %v797
      %v1386 = vsel %vm1361, %v1355, %v799
      %v1387 = vsel %vm1361, %v1356, %v801
      %v1388 = vsel %vm1361, %v1357, %v803
      %v1389 = vsel %vm1361, %v1358, %v805
      %v1390 = vsel %vm1361, %v1359, %v807
      %v1391 = vsel %vm1361, %v1360, %v809
      %vm1392 = vcmask 130048
      %v1393 = vsel %vm1392, %v1362, %v843
      %v1394 = vsel %vm1392, %v1363, %v845
      %v1395 = vsel %vm1392, %v1364, %v847
      %v1396 = vsel %vm1392, %v1365, %v849
      %v1397 = vsel %vm1392, %v1366, %v851
      %v1398 = vsel %vm1392, %v1367, %v853
      %v1399 = vsel %vm1392, %v1368, %v855
      %v1400 = vsel %vm1392, %v1369, %v857
      %v1401 = vsel %vm1392, %v1370, %v859
      %v1402 = vsel %vm1392, %v1371, %v861
      %v1403 = vsel %vm1392, %v1372, %v863
      %v1404 = vsel %vm1392, %v1373, %v865
      %v1405 = vsel %vm1392, %v1374, %v867
      %v1406 = vsel %vm1392, %v1375, %v869
      %v1407 = vsel %vm1392, %v1376, %v871
      %v1408 = vsel %vm1392, %v1377, %v873
      %v1409 = vsel %vm1392, %v1378, %v875
      %v1410 = vsel %vm1392, %v1379, %v877
      %v1411 = vsel %vm1392, %v1380, %v879
      %v1412 = vsel %vm1392, %v1381, %v881
      %v1413 = vsel %vm1392, %v1382, %v883
      %v1414 = vsel %vm1392, %v1383, %v885
      %v1415 = vsel %vm1392, %v1384, %v887
      %v1416 = vsel %vm1392, %v1385, %v889
      %v1417 = vsel %vm1392, %v1386, %v891
      %v1418 = vsel %vm1392, %v1387, %v893
      %v1419 = vsel %vm1392, %v1388, %v895
      %v1420 = vsel %vm1392, %v1389, %v897
      %v1421 = vsel %vm1392, %v1390, %v899
      %v1422 = vsel %vm1392, %v1391, %v901
      %vm1423 = vcmask 162816
      %v1424 = vsel %vm1423, %v1393, %v935
      %v1425 = vsel %vm1423, %v1394, %v937
      %v1426 = vsel %vm1423, %v1395, %v939
      %v1427 = vsel %vm1423, %v1396, %v941
      %v1428 = vsel %vm1423, %v1397, %v943
      %v1429 = vsel %vm1423, %v1398, %v945
      %v1430 = vsel %vm1423, %v1399, %v947
      %v1431 = vsel %vm1423, %v1400, %v949
      %v1432 = vsel %vm1423, %v1401, %v951
      %v1433 = vsel %vm1423, %v1402, %v953
      %v1434 = vsel %vm1423, %v1403, %v955
      %v1435 = vsel %vm1423, %v1404, %v957
      %v1436 = vsel %vm1423, %v1405, %v959
      %v1437 = vsel %vm1423, %v1406, %v961
      %v1438 = vsel %vm1423, %v1407, %v963
      %v1439 = vsel %vm1423, %v1408, %v965
      %v1440 = vsel %vm1423, %v1409, %v967
      %v1441 = vsel %vm1423, %v1410, %v969
      %v1442 = vsel %vm1423, %v1411, %v971
      %v1443 = vsel %vm1423, %v1412, %v973
      %v1444 = vsel %vm1423, %v1413, %v975
      %v1445 = vsel %vm1423, %v1414, %v977
      %v1446 = vsel %vm1423, %v1415, %v979
      %v1447 = vsel %vm1423, %v1416, %v981
      %v1448 = vsel %vm1423, %v1417, %v983
      %v1449 = vsel %vm1423, %v1418, %v985
      %v1450 = vsel %vm1423, %v1419, %v987
      %v1451 = vsel %vm1423, %v1420, %v989
      %v1452 = vsel %vm1423, %v1421, %v991
      %v1453 = vsel %vm1423, %v1422, %v993
      %vm1454 = vcmask 195584
      %v1455 = vsel %vm1454, %v1424, %v1027
      %v1456 = vsel %vm1454, %v1425, %v1029
      %v1457 = vsel %vm1454, %v1426, %v1031
      %v1458 = vsel %vm1454, %v1427, %v1033
      %v1459 = vsel %vm1454, %v1428, %v1035
      %v1460 = vsel %vm1454, %v1429, %v1037
      %v1461 = vsel %vm1454, %v1430, %v1039
      %v1462 = vsel %vm1454, %v1431, %v1041
      %v1463 = vsel %vm1454, %v1432, %v1043
      %v1464 = vsel %vm1454, %v1433, %v1045
      %v1465 = vsel %vm1454, %v1434, %v1047
      %v1466 = vsel %vm1454, %v1435, %v1049
      %v1467 = vsel %vm1454, %v1436, %v1051
      %v1468 = vsel %vm1454, %v1437, %v1053
      %v1469 = vsel %vm1454, %v1438, %v1055
      %v1470 = vsel %vm1454, %v1439, %v1057
      %v1471 = vsel %vm1454, %v1440, %v1059
      %v1472 = vsel %vm1454, %v1441, %v1061
      %v1473 = vsel %vm1454, %v1442, %v1063
      %v1474 = vsel %vm1454, %v1443, %v1065
      %v1475 = vsel %vm1454, %v1444, %v1067
      %v1476 = vsel %vm1454, %v1445, %v1069
      %v1477 = vsel %vm1454, %v1446, %v1071
      %v1478 = vsel %vm1454, %v1447, %v1073
      %v1479 = vsel %vm1454, %v1448, %v1075
      %v1480 = vsel %vm1454, %v1449, %v1077
      %v1481 = vsel %vm1454, %v1450, %v1079
      %v1482 = vsel %vm1454, %v1451, %v1081
      %v1483 = vsel %vm1454, %v1452, %v1083
      %v1484 = vsel %vm1454, %v1453, %v1085
      %vm1485 = vcmask 228352
      %v1486 = vsel %vm1485, %v1455, %v1119
      %v1487 = vsel %vm1485, %v1456, %v1121
      %v1488 = vsel %vm1485, %v1457, %v1123
      %v1489 = vsel %vm1485, %v1458, %v1125
      %v1490 = vsel %vm1485, %v1459, %v1127
      %v1491 = vsel %vm1485, %v1460, %v1129
      %v1492 = vsel %vm1485, %v1461, %v1131
      %v1493 = vsel %vm1485, %v1462, %v1133
      %v1494 = vsel %vm1485, %v1463, %v1135
      %v1495 = vsel %vm1485, %v1464, %v1137
      %v1496 = vsel %vm1485, %v1465, %v1139
      %v1497 = vsel %vm1485, %v1466, %v1141
      %v1498 = vsel %vm1485, %v1467, %v1143
      %v1499 = vsel %vm1485, %v1468, %v1145
      %v1500 = vsel %vm1485, %v1469, %v1147
      %v1501 = vsel %vm1485, %v1470, %v1149
      %v1502 = vsel %vm1485, %v1471, %v1151
      %v1503 = vsel %vm1485, %v1472, %v1153
      %v1504 = vsel %vm1485, %v1473, %v1155
      %v1505 = vsel %vm1485, %v1474, %v1157
      %v1506 = vsel %vm1485, %v1475, %v1159
      %v1507 = vsel %vm1485, %v1476, %v1161
      %v1508 = vsel %vm1485, %v1477, %v1163
      %v1509 = vsel %vm1485, %v1478, %v1165
      %v1510 = vsel %vm1485, %v1479, %v1167
      %v1511 = vsel %vm1485, %v1480, %v1169
      %v1512 = vsel %vm1485, %v1481, %v1171
      %v1513 = vsel %vm1485, %v1482, %v1173
      %v1514 = vsel %vm1485, %v1483, %v1175
      %v1515 = vsel %vm1485, %v1484, %v1177
      %vm1516 = vcmask 261120
      %v1517 = vsel %vm1516, %v1486, %v1211
      %v1518 = vsel %vm1516, %v1487, %v1213
      %v1519 = vsel %vm1516, %v1488, %v1215
      %v1520 = vsel %vm1516, %v1489, %v1217
      %v1521 = vsel %vm1516, %v1490, %v1219
      %v1522 = vsel %vm1516, %v1491, %v1221
      %v1523 = vsel %vm1516, %v1492, %v1223
      %v1524 = vsel %vm1516, %v1493, %v1225
      %v1525 = vsel %vm1516, %v1494, %v1227
      %v1526 = vsel %vm1516, %v1495, %v1229
      %v1527 = vsel %vm1516, %v1496, %v1231
      %v1528 = vsel %vm1516, %v1497, %v1233
      %v1529 = vsel %vm1516, %v1498, %v1235
      %v1530 = vsel %vm1516, %v1499, %v1237
      %v1531 = vsel %vm1516, %v1500, %v1239
      %v1532 = vsel %vm1516, %v1501, %v1241
      %v1533 = vsel %vm1516, %v1502, %v1243
      %v1534 = vsel %vm1516, %v1503, %v1245
      %v1535 = vsel %vm1516, %v1504, %v1247
      %v1536 = vsel %vm1516, %v1505, %v1249
      %v1537 = vsel %vm1516, %v1506, %v1251
      %v1538 = vsel %vm1516, %v1507, %v1253
      %v1539 = vsel %vm1516, %v1508, %v1255
      %v1540 = vsel %vm1516, %v1509, %v1257
      %v1541 = vsel %vm1516, %v1510, %v1259
      %v1542 = vsel %vm1516, %v1511, %v1261
      %v1543 = vsel %vm1516, %v1512, %v1263
      %v1544 = vsel %vm1516, %v1513, %v1265
      %v1545 = vsel %vm1516, %v1514, %v1267
      %v1546 = vsel %vm1516, %v1515, %v1269
      %v1547 = vld [vmem:[%s2] sm:$0xff]
      %v1548 = vld [vmem:[%s3] sm:$0xff]
      %1550 = vset.pattern.permute.xlu0 0
      %1551 = vperm.xlu0 %1550, %v1548
      %v1552 = vpop.permute.xlu0 %1551
      %vm1554 = vcmask 293888
      %v1556 = vsel %vm1554, %v1547, 0
      %v1559 = vsel %vm1554, %v1517, 0
      %v1562 = vsel %vm1554, %v1518, 0
      %v1565 = vsel %vm1554, %v1519, 0
      %v1568 = vsel %vm1554, %v1520, 0
      %v1571 = vsel %vm1554, %v1521, 0
      %v1574 = vsel %vm1554, %v1522, 0
      %v1577 = vsel %vm1554, %v1523, 0
      %v1580 = vsel %vm1554, %v1524, 0
      %v1583 = vsel %vm1554, %v1525, 0
      %v1586 = vsel %vm1554, %v1526, 0
      %v1589 = vsel %vm1554, %v1527, 0
      %v1592 = vsel %vm1554, %v1528, 0
      %v1595 = vsel %vm1554, %v1529, 0
      %v1598 = vsel %vm1554, %v1530, 0
      %v1601 = vsel %vm1554, %v1531, 0
      %v1604 = vsel %vm1554, %v1532, 0
      %v1607 = vsel %vm1554, %v1533, 0
      %v1610 = vsel %vm1554, %v1534, 0
      %v1613 = vsel %vm1554, %v1535, 0
      %v1616 = vsel %vm1554, %v1536, 0
      %v1619 = vsel %vm1554, %v1537, 0
      %v1622 = vsel %vm1554, %v1538, 0
      %v1625 = vsel %vm1554, %v1539, 0
      %v1628 = vsel %vm1554, %v1540, 0
      %v1631 = vsel %vm1554, %v1541, 0
      %v1634 = vsel %vm1554, %v1542, 0
      %v1637 = vsel %vm1554, %v1543, 0
      %v1640 = vsel %vm1554, %v1544, 0
      %v1643 = vsel %vm1554, %v1545, 0
      %v1646 = vsel %vm1554, %v1546, 0
      %1648 = vmatprep.subr.mxu0 0.0
      %1649 = vmatpush1.xpose.msra.mxu0 %v1559
      %1650 = vmatprep.subr.mxu0 0.0
      %1651 = vmatpush1.xpose.msra.mxu0 %v1562
      %1652 = vmatprep.subr.mxu0 0.0
      %1653 = vmatpush1.xpose.msra.mxu0 %v1565
      %1654 = vmatprep.subr.mxu0 0.0
      %1655 = vmatpush1.xpose.msra.mxu0 %v1568
      %1656 = vmatprep.subr.mxu0 0.0
      %1657 = vmatpush1.xpose.msra.mxu0 %v1571
      %1658 = vmatprep.subr.mxu0 0.0
      %1659 = vmatpush1.xpose.msra.mxu0 %v1574
      %1660 = vmatprep.subr.mxu0 0.0
      %1661 = vmatpush1.xpose.msra.mxu0 %v1577
      %1662 = vmatprep.subr.mxu0 0.0
      %1663 = vmatpush1.xpose.msra.mxu0 %v1580
      %1664 = vmatprep.subr.mxu0 0.0
      %1665 = vmatpush1.xpose.msra.mxu0 %v1583
      %1666 = vmatprep.subr.mxu0 0.0
      %1667 = vmatpush1.xpose.msra.mxu0 %v1586
      %1668 = vmatprep.subr.mxu0 0.0
      %1669 = vmatpush1.xpose.msra.mxu0 %v1589
      %1670 = vmatprep.subr.mxu0 0.0
      %1671 = vmatpush1.xpose.msra.mxu0 %v1592
      %1672 = vmatprep.subr.mxu0 0.0
      %1673 = vmatpush1.xpose.msra.mxu0 %v1595
      %1674 = vmatprep.subr.mxu0 0.0
      %1675 = vmatpush1.xpose.msra.mxu0 %v1598
      %1676 = vmatprep.subr.mxu0 0.0
      %1677 = vmatpush1.xpose.msra.mxu0 %v1601
      %1678 = vmatprep.subr.mxu0 0.0
      %1679 = vmatpush1.xpose.msra.mxu0 %v1604
      %1680 = vmatprep.subr.mxu0 0.0
      %1681 = vmatpush1.xpose.msra.mxu0 %v1607
      %1682 = vmatprep.subr.mxu0 0.0
      %1683 = vmatpush1.xpose.msra.mxu0 %v1610
      %1684 = vmatprep.subr.mxu0 0.0
      %1685 = vmatpush1.xpose.msra.mxu0 %v1613
      %1686 = vmatprep.subr.mxu0 0.0
      %1687 = vmatpush1.xpose.msra.mxu0 %v1616
      %1688 = vmatprep.subr.mxu0 0.0
      %1689 = vmatpush1.xpose.msra.mxu0 %v1619
      %1690 = vmatprep.subr.mxu0 0.0
      %1691 = vmatpush1.xpose.msra.mxu0 %v1622
      %1692 = vmatprep.subr.mxu0 0.0
      %1693 = vmatpush1.xpose.msra.mxu0 %v1625
      %1694 = vmatprep.subr.mxu0 0.0
      %1695 = vmatpush1.xpose.msra.mxu0 %v1628
      %1696 = vmatprep.subr.mxu0 0.0
      %1697 = vmatpush1.xpose.msra.mxu0 %v1631
      %1698 = vmatprep.subr.mxu0 0.0
      %1699 = vmatpush1.xpose.msra.mxu0 %v1634
      %1700 = vmatprep.subr.mxu0 0.0
      %1701 = vmatpush1.xpose.msra.mxu0 %v1637
      %1702 = vmatprep.subr.mxu0 0.0
      %1703 = vmatpush1.xpose.msra.mxu0 %v1640
      %1704 = vmatprep.subr.mxu0 0.0
      %1705 = vmatpush1.xpose.msra.mxu0 %v1643
      %1706 = vmatprep.subr.mxu0 0.0
      %1707 = vmatpush1.xpose.msra.mxu0 %v1646
      %1708 = vmatprep.subr.mxu0 0.0
      %1709 = vmatpush1.xpose.msra.mxu0 0.0
      %1710 = vmatprep.subr.mxu0 0.0
      %1711 = vmatpush1.xpose.msra.mxu0 0.0
      %1712 = vmatprep.mubr.f32.mxu0 0.0
      %1713 = vmatmul.mubr.f32.gmra.mrb[0].mxu0 %v1556
      %v1714 = vpop.f32.mrb[0].mxu0
      %v1715 = vadd.f32 %v1552, %v1714
      %v1716 = vpop.f32.mrb[0].mxu0
      %v1717 = vadd.f32 %v1552, %v1716
      %1718 = vdwg.mxu0
      %1719 = vst [vmem:[%s305] sm:$0xff] %v1715
      %vm1720 = vcmask 916480
      %1721 = vst.msk [vmem:[%s305 + $0x8] sm:$0xff] %vm1720, %v1717
      %s1722 = smul.u32 2, %s20
      %p1723 = scmp.lt.s32.totalorder %s19, 1
      %s1724 = scalar_select %p1723, %s19, 1
      %p1725 = scmp.lt.s32.totalorder %s1722, 1
      %s1726 = scalar_select %p1725, %s1722, 1
      %s1727 = smul.addr %s1724, 2
      %s1728 = sadd.s32 %s1726, %s1727
      %s1729 = smul.addr %s1728, 8
      %s1730 = scalar_lea.vmem %s4, %s1729
      // Predicated region
      $region37: #{conv_block_forward.1} parent=35 // pred_check
        %p1731 = pneg %p149
      $region38: #{conv_block_forward.1} parent=35 // pred_check_branch
        %1733 = sbr.rel (%p1731) target = $region40
      $region39: #{conv_block_forward.1} parent=35 // pred_region
        %s1734 = smul.u32 2, %s20
      $region40: #{conv_block_forward.1} parent=35 // pred_fallthru
        _
    $region36: #{conv_block_forward.1} parent=5 // pred_fallthru
      _
    %p1735 = scmp.le.s32.totalorder 2, %s10
    // Predicated region
    $region41: #{conv_block_forward.1} parent=5 // pred_check
      %p1736 = pneg %p1735
    $region42: #{conv_block_forward.1} parent=5 // pred_check_branch
      %1738 = sbr.rel (%p1736) target = $region44
    $region43: #{conv_block_forward.1} parent=5 // pred_region
      %s1739 = ssub.s32 %s10, 2
      // Predicated region
      $region45: #{conv_block_forward.1} parent=43 // pred_check
        %p1740 = pneg %p155
      $region46: #{conv_block_forward.1} parent=43 // pred_check_branch
        %1742 = sbr.rel (%p1740) target = $region48
      $region47: #{conv_block_forward.1} parent=43 // pred_region
        %s1743 = smul.u32 2, %s22
        %p1744 = scmp.lt.s32.totalorder %s21, 1
        %s1745 = scalar_select %p1744, %s21, 1
        %p1746 = scmp.lt.s32.totalorder %s1743, 1
        %s1747 = scalar_select %p1746, %s1743, 1
        %s1748 = smul.addr %s1745, 2
        %s1749 = sadd.s32 %s1747, %s1748
        %s1750 = smul.addr %s1749, 8
        %s1751 = scalar_lea.vmem %s4, %s1750
      $region48: #{conv_block_forward.1} parent=43 // pred_fallthru
        _
    $region44: #{conv_block_forward.1} parent=5 // pred_fallthru
      _
  $region6: #{conv_block_forward.1} parent=0 // loop_footer
    %s14 = sadd.s32 1, %s10
  $region7: #{conv_block_forward.1} parent=0 // loop_footer_branch
    %9 = sbr.rel target = $region3
  $region8: #{conv_block_forward.1} parent=0 // loop_exit
    _

</llo_original>
